<compile_context>
chip_gen: v6e
topology: v6e:2x2x1
jax: 0.10.0
libtpu: 0.0.40
codegen_flags: <defaults>
</compile_context>

<pallas_src>
import functools
import numpy as np
import jax
import jax.numpy as jnp
from jax import lax
from jax.experimental import pallas as pl
from jax.experimental.pallas import tpu as pltpu


def _conv_bn_relu_kernel(x_ref, w_ref, gb_ref, o_ref, *,
                         N, Cin, Cout, H, W, eps, matmul_dtype):
    P = H * W          # pixels per sample (lane block per sample, multiple of 128)
    L = N * P          # total lanes (batch folded into lanes)
    S = 128            # aligned zero-lane padding each side (>= max tap shift W+1)

    # ---- in-kernel im2col, stage 1: one lane-major pixel row for the whole batch.
    # xs_wide[ci, S + n*P + h*W + w] = x[n, ci, h, w]; 128 zero lanes on both ends so
    # every shifted tap is a plain in-bounds static slice.  All concat pieces start
    # at multiples of 128 -> aligned placement, no relayout.
    pieces = [jnp.zeros((Cin, S), jnp.float32)]
    for n in range(N):
        pieces.append(x_ref[n])                     # (Cin, P)
    pieces.append(jnp.zeros((Cin, S), jnp.float32))
    xw = jnp.concatenate(pieces, axis=1)            # (Cin, L + 2*S)

    # Per-output-lane pixel coordinates (power-of-two dims -> bit ops only, no div).
    lane = lax.broadcasted_iota(jnp.int32, (Cin, L), 1)
    pix = lane & (P - 1)                            # h*W + w within the sample
    col = lane & (W - 1)                            # w

    # ---- in-kernel im2col, stage 2 + conv: 9 shifted taps, boundary-masked, each
    # feeding a small MXU matmul accumulated in f32 (in-place MRB accumulate on v7x).
    y = jnp.zeros((Cout, L), jnp.float32)
    for dy in range(3):
        for dx in range(3):
            r, c = dy - 1, dx - 1
            d = r * W + c                           # flattened-lane shift of this tap
            tap = xw[:, S + d:S + d + L]            # (Cin, L) static lane slice

            # zero the lanes whose source pixel falls outside the image (this also
            # kills any cross-sample / zero-pad reads at the slice boundaries)
            conds = []
            if r < 0:
                conds.append(pix >= (-r) * W)       # h + r >= 0
            if r > 0:
                conds.append(pix < (H - r) * W)     # h + r <  H
            if c < 0:
                conds.append(col >= -c)             # w + c >= 0
            if c > 0:
                conds.append(col < W - c)           # w + c <  W
            if conds:
                m = conds[0]
                for extra in conds[1:]:
                    m = m & extra
                tap = jnp.where(m, tap, 0.0)

            wt = w_ref[dy * 3 + dx]                 # (Cout, Cin) tap weights
            if matmul_dtype != jnp.float32:         # bf16 MXU path for v6e/v7x
                tap = tap.astype(matmul_dtype)
                wt = wt.astype(matmul_dtype)
            y = y + jnp.dot(wt, tap, preferred_element_type=jnp.float32)

    # ---- BatchNorm2d (training mode), single traversal: sum and sum-of-squares.
    inv_cnt = 1.0 / float(L)
    ssum = jnp.sum(y, axis=1, keepdims=True)        # (Cout, 1) lane reduction
    ssq = jnp.sum(y * y, axis=1, keepdims=True)     # (Cout, 1)
    mean = ssum * inv_cnt
    var = jnp.maximum(ssq * inv_cnt - mean * mean, 0.0)   # biased variance

    # ---- fused affine + ReLU (per-channel math stays on (Cout,1) vectors, f32).
    gamma = gb_ref[:, 0:1]                          # (Cout, 1)
    beta = gb_ref[:, 1:2]                           # (Cout, 1)
    scale = gamma * lax.rsqrt(var + eps)            # rsqrt -> EUP slot
    shift = beta - mean * scale

    out = jnp.maximum(y * scale + shift, 0.0)       # (Cout, L)

    # dense 256-lane, 128-aligned stores; output rows already in (n, cout) order
    for n in range(N):
        o_ref[n] = out[:, n * P:(n + 1) * P]


def conv_bn_relu_forward(x, conv_w, conv_b, bn_gamma, bn_beta, eps=1e-5,
                         matmul_dtype=jnp.float32):
    """x: (N, Cin, H, W) f32 NCHW. conv_w: (Cout, Cin, 3, 3). Returns (N, Cout, H, W)."""
    N, Cin, H, W = x.shape
    Cout, Cin2, KH, KW = conv_w.shape
    assert (KH, KW) == (3, 3) and Cin2 == Cin
    P = H * W
    # in-kernel lane index math uses bit ops -> needs power-of-two W and H*W, and
    # lane-aligned per-sample blocks.
    assert (W & (W - 1)) == 0 and (P & (P - 1)) == 0 and P % 128 == 0
    # TODO(synk): non-power-of-two spatial dims need rem/div-based (or precomputed)
    # boundary masks; add that path before generalizing.

    # glue is now pure reshapes + tiny per-tap weight reorder (no pad/im2col/kron pass)
    x3 = x.reshape(N, Cin, P).astype(jnp.float32)                       # (N, Cin, P)
    w_taps = jnp.transpose(conv_w.astype(jnp.float32),
                           (2, 3, 0, 1)).reshape(9, Cout, Cin)          # (9, Cout, Cin)

    # conv bias dropped: exactly cancelled by training-mode BN mean subtraction.
    # (Must be re-added if this kernel is reused with running stats / eval mode.)
    del conv_b

    gb = jnp.stack([bn_gamma, bn_beta], axis=1).astype(jnp.float32)     # (Cout, 2)

    kernel = functools.partial(_conv_bn_relu_kernel, N=N, Cin=Cin, Cout=Cout,
                               H=H, W=W, eps=eps, matmul_dtype=matmul_dtype)
    vspec = pl.BlockSpec(memory_space=pltpu.MemorySpace.VMEM)

    # TODO(synk): at realistic sizes (Cout >= 128, large H*W) switch to a pixel-major
    # matmul ((pixel_tile, Cin*9) @ (Cin*9, Cout)) with a pixel-tiled grid: BN
    # sum/sumsq accumulated in VMEM scratch across an "arbitrary" reduction axis
    # (pl.when init/finalize) plus a second apply pass, "parallel" axes for v7x's
    # 2 TensorCores, bf16 matmul operands on v6e/v7x, and tiles sized for v7x's
    # 64 MiB VMEM via pltpu.CompilerParams(vmem_limit_bytes=...).
    out3 = pl.pallas_call(
        kernel,
        out_shape=jax.ShapeDtypeStruct((N, Cout, P), jnp.float32),
        in_specs=[vspec, vspec, vspec],
        out_specs=vspec,
    )(x3, w_taps, gb)

    # pure reshape -- kernel output is already (n, cout, pixel) ordered
    return out3.reshape(N, Cout, H, W)


def _reference(x, conv_w, conv_b, bn_gamma, bn_beta, eps=1e-5):
    y = lax.conv_general_dilated(
        x, conv_w, window_strides=(1, 1), padding=((1, 1), (1, 1)),
        dimension_numbers=("NCHW", "OIHW", "NCHW"),
        precision=lax.Precision.HIGHEST)
    y = y + conv_b[None, :, None, None]
    mean = jnp.mean(y, axis=(0, 2, 3), keepdims=True)
    var = jnp.var(y, axis=(0, 2, 3), keepdims=True)   # biased, like BN training mode
    yhat = (y - mean) * lax.rsqrt(var + eps)
    return jnp.maximum(yhat * bn_gamma[None, :, None, None] + bn_beta[None, :, None, None], 0.0)


if __name__ == "__main__":
    # small shapes consistent with the module: batch=2, in_channels=4, out_channels=8, 16x16
    N, Cin, H, W = 2, 4, 16, 16
    Cout = 8

    key = jax.random.PRNGKey(0)
    kx, kw, kb, kg, kbe = jax.random.split(key, 5)
    x = jax.random.normal(kx, (N, Cin, H, W), dtype=jnp.float32)
    conv_w = 0.5 * jax.random.normal(kw, (Cout, Cin, 3, 3), dtype=jnp.float32)
    conv_b = 0.1 * jax.random.normal(kb, (Cout,), dtype=jnp.float32)
    bn_gamma = 1.0 + 0.1 * jax.random.normal(kg, (Cout,), dtype=jnp.float32)
    bn_beta = 0.1 * jax.random.normal(kbe, (Cout,), dtype=jnp.float32)

    out = conv_bn_relu_forward(x, conv_w, conv_b, bn_gamma, bn_beta)
    out = jax.block_until_ready(out)

    ref = _reference(x, conv_w, conv_b, bn_gamma, bn_beta)
    assert out.shape == (N, Cout, H, W)
    np.testing.assert_allclose(np.asarray(out), np.asarray(ref), atol=1e-3, rtol=1e-3)
    print("KERNEL_OK")
</pallas_src>

<mosaic_0001>
module attributes {stable_mosaic.version = 11 : i64} {
  func.func @_conv_bn_relu_kernel(%arg0: memref<2x4x256xf32, #tpu.memory_space<vmem>>, %arg1: memref<9x8x4xf32, #tpu.memory_space<vmem>>, %arg2: memref<8x2xf32, #tpu.memory_space<vmem>>, %arg3: memref<2x8x256xf32, #tpu.memory_space<vmem>>) attributes {dimension_semantics = [], scalar_prefetch = 0 : i64, scratch_operands = 0 : i64, tpu.core_type = #tpu.core_type<tc>} {
    %cst = arith.constant 0.000000e+00 : f32
    %0 = vector.broadcast %cst : f32 to vector<4x128xf32>
    %c0 = arith.constant 0 : index
    %c0_0 = arith.constant 0 : index
    %c0_1 = arith.constant 0 : index
    %1 = vector.load %arg0[%c0, %c0_0, %c0_1] : memref<2x4x256xf32, #tpu.memory_space<vmem>>, vector<1x4x256xf32>
    %2 = vector.shape_cast %1 : vector<1x4x256xf32> to vector<4x256xf32>
    %c1 = arith.constant 1 : index
    %c0_2 = arith.constant 0 : index
    %c0_3 = arith.constant 0 : index
    %3 = vector.load %arg0[%c1, %c0_2, %c0_3] : memref<2x4x256xf32, #tpu.memory_space<vmem>>, vector<1x4x256xf32>
    %4 = vector.shape_cast %3 : vector<1x4x256xf32> to vector<4x256xf32>
    %cst_4 = arith.constant 0.000000e+00 : f32
    %5 = vector.broadcast %cst_4 : f32 to vector<4x128xf32>
    %6 = tpu.concatenate %0, %2, %4, %5 in 1 : vector<4x128xf32>, vector<4x256xf32>, vector<4x256xf32>, vector<4x128xf32> -> vector<4x768xf32>
    %7 = tpu.iota {dimensions = array<i32: 1>} : vector<4x512xi32>
    %c255_i32 = arith.constant 255 : i32
    %8 = vector.broadcast %c255_i32 : i32 to vector<4x512xi32>
    %9 = arith.andi %7, %8 : vector<4x512xi32>
    %c15_i32 = arith.constant 15 : i32
    %10 = vector.broadcast %c15_i32 : i32 to vector<4x512xi32>
    %11 = arith.andi %7, %10 : vector<4x512xi32>
    %cst_5 = arith.constant 0.000000e+00 : f32
    %12 = vector.broadcast %cst_5 : f32 to vector<8x512xf32>
    %13 = vector.extract_strided_slice %6 {offsets = [0, 111], sizes = [4, 512], strides = [1, 1]} : vector<4x768xf32> to vector<4x512xf32>
    %c16_i32 = arith.constant 16 : i32
    %14 = vector.broadcast %c16_i32 : i32 to vector<4x512xi32>
    %15 = arith.cmpi sge, %9, %14 : vector<4x512xi32>
    %c1_i32 = arith.constant 1 : i32
    %16 = vector.broadcast %c1_i32 : i32 to vector<4x512xi32>
    %17 = arith.cmpi sge, %11, %16 : vector<4x512xi32>
    %18 = arith.andi %15, %17 : vector<4x512xi1>
    %cst_6 = arith.constant 0.000000e+00 : f32
    %19 = vector.broadcast %cst_6 : f32 to vector<4x512xf32>
    %20 = arith.select %18, %13, %19 : vector<4x512xi1>, vector<4x512xf32>
    %c0_7 = arith.constant 0 : index
    %c0_8 = arith.constant 0 : index
    %c0_9 = arith.constant 0 : index
    %21 = vector.load %arg1[%c0_7, %c0_8, %c0_9] : memref<9x8x4xf32, #tpu.memory_space<vmem>>, vector<1x8x4xf32>
    %22 = vector.shape_cast %21 : vector<1x8x4xf32> to vector<8x4xf32>
    %cst_10 = arith.constant dense<0.000000e+00> : vector<8x512xf32>
    %23 = tpu.matmul %22, %20, %cst_10 {dimension_numbers = #tpu.dot_dimension_numbers<[1], [0], [0], [1], [0, 0, 1, 1], [], []>} : vector<8x4xf32>, vector<4x512xf32>, vector<8x512xf32> -> vector<8x512xf32>
    %24 = arith.addf %12, %23 : vector<8x512xf32>
    %25 = vector.extract_strided_slice %6 {offsets = [0, 112], sizes = [4, 512], strides = [1, 1]} : vector<4x768xf32> to vector<4x512xf32>
    %c16_i32_11 = arith.constant 16 : i32
    %26 = vector.broadcast %c16_i32_11 : i32 to vector<4x512xi32>
    %27 = arith.cmpi sge, %9, %26 : vector<4x512xi32>
    %cst_12 = arith.constant 0.000000e+00 : f32
    %28 = vector.broadcast %cst_12 : f32 to vector<4x512xf32>
    %29 = arith.select %27, %25, %28 : vector<4x512xi1>, vector<4x512xf32>
    %c1_13 = arith.constant 1 : index
    %c0_14 = arith.constant 0 : index
    %c0_15 = arith.constant 0 : index
    %30 = vector.load %arg1[%c1_13, %c0_14, %c0_15] : memref<9x8x4xf32, #tpu.memory_space<vmem>>, vector<1x8x4xf32>
    %31 = vector.shape_cast %30 : vector<1x8x4xf32> to vector<8x4xf32>
    %cst_16 = arith.constant dense<0.000000e+00> : vector<8x512xf32>
    %32 = tpu.matmul %31, %29, %cst_16 {dimension_numbers = #tpu.dot_dimension_numbers<[1], [0], [0], [1], [0, 0, 1, 1], [], []>} : vector<8x4xf32>, vector<4x512xf32>, vector<8x512xf32> -> vector<8x512xf32>
    %33 = arith.addf %24, %32 : vector<8x512xf32>
    %34 = vector.extract_strided_slice %6 {offsets = [0, 113], sizes = [4, 512], strides = [1, 1]} : vector<4x768xf32> to vector<4x512xf32>
    %c16_i32_17 = arith.constant 16 : i32
    %35 = vector.broadcast %c16_i32_17 : i32 to vector<4x512xi32>
    %36 = arith.cmpi sge, %9, %35 : vector<4x512xi32>
    %c15_i32_18 = arith.constant 15 : i32
    %37 = vector.broadcast %c15_i32_18 : i32 to vector<4x512xi32>
    %38 = arith.cmpi slt, %11, %37 : vector<4x512xi32>
    %39 = arith.andi %36, %38 : vector<4x512xi1>
    %cst_19 = arith.constant 0.000000e+00 : f32
    %40 = vector.broadcast %cst_19 : f32 to vector<4x512xf32>
    %41 = arith.select %39, %34, %40 : vector<4x512xi1>, vector<4x512xf32>
    %c2 = arith.constant 2 : index
    %c0_20 = arith.constant 0 : index
    %c0_21 = arith.constant 0 : index
    %42 = vector.load %arg1[%c2, %c0_20, %c0_21] : memref<9x8x4xf32, #tpu.memory_space<vmem>>, vector<1x8x4xf32>
    %43 = vector.shape_cast %42 : vector<1x8x4xf32> to vector<8x4xf32>
    %cst_22 = arith.constant dense<0.000000e+00> : vector<8x512xf32>
    %44 = tpu.matmul %43, %41, %cst_22 {dimension_numbers = #tpu.dot_dimension_numbers<[1], [0], [0], [1], [0, 0, 1, 1], [], []>} : vector<8x4xf32>, vector<4x512xf32>, vector<8x512xf32> -> vector<8x512xf32>
    %45 = arith.addf %33, %44 : vector<8x512xf32>
    %46 = vector.extract_strided_slice %6 {offsets = [0, 127], sizes = [4, 512], strides = [1, 1]} : vector<4x768xf32> to vector<4x512xf32>
    %c1_i32_23 = arith.constant 1 : i32
    %47 = vector.broadcast %c1_i32_23 : i32 to vector<4x512xi32>
    %48 = arith.cmpi sge, %11, %47 : vector<4x512xi32>
    %cst_24 = arith.constant 0.000000e+00 : f32
    %49 = vector.broadcast %cst_24 : f32 to vector<4x512xf32>
    %50 = arith.select %48, %46, %49 : vector<4x512xi1>, vector<4x512xf32>
    %c3 = arith.constant 3 : index
    %c0_25 = arith.constant 0 : index
    %c0_26 = arith.constant 0 : index
    %51 = vector.load %arg1[%c3, %c0_25, %c0_26] : memref<9x8x4xf32, #tpu.memory_space<vmem>>, vector<1x8x4xf32>
    %52 = vector.shape_cast %51 : vector<1x8x4xf32> to vector<8x4xf32>
    %cst_27 = arith.constant dense<0.000000e+00> : vector<8x512xf32>
    %53 = tpu.matmul %52, %50, %cst_27 {dimension_numbers = #tpu.dot_dimension_numbers<[1], [0], [0], [1], [0, 0, 1, 1], [], []>} : vector<8x4xf32>, vector<4x512xf32>, vector<8x512xf32> -> vector<8x512xf32>
    %54 = arith.addf %45, %53 : vector<8x512xf32>
    %55 = vector.extract_strided_slice %6 {offsets = [0, 128], sizes = [4, 512], strides = [1, 1]} : vector<4x768xf32> to vector<4x512xf32>
    %c4 = arith.constant 4 : index
    %c0_28 = arith.constant 0 : index
    %c0_29 = arith.constant 0 : index
    %56 = vector.load %arg1[%c4, %c0_28, %c0_29] : memref<9x8x4xf32, #tpu.memory_space<vmem>>, vector<1x8x4xf32>
    %57 = vector.shape_cast %56 : vector<1x8x4xf32> to vector<8x4xf32>
    %cst_30 = arith.constant dense<0.000000e+00> : vector<8x512xf32>
    %58 = tpu.matmul %57, %55, %cst_30 {dimension_numbers = #tpu.dot_dimension_numbers<[1], [0], [0], [1], [0, 0, 1, 1], [], []>} : vector<8x4xf32>, vector<4x512xf32>, vector<8x512xf32> -> vector<8x512xf32>
    %59 = arith.addf %54, %58 : vector<8x512xf32>
    %60 = vector.extract_strided_slice %6 {offsets = [0, 129], sizes = [4, 512], strides = [1, 1]} : vector<4x768xf32> to vector<4x512xf32>
    %c15_i32_31 = arith.constant 15 : i32
    %61 = vector.broadcast %c15_i32_31 : i32 to vector<4x512xi32>
    %62 = arith.cmpi slt, %11, %61 : vector<4x512xi32>
    %cst_32 = arith.constant 0.000000e+00 : f32
    %63 = vector.broadcast %cst_32 : f32 to vector<4x512xf32>
    %64 = arith.select %62, %60, %63 : vector<4x512xi1>, vector<4x512xf32>
    %c5 = arith.constant 5 : index
    %c0_33 = arith.constant 0 : index
    %c0_34 = arith.constant 0 : index
    %65 = vector.load %arg1[%c5, %c0_33, %c0_34] : memref<9x8x4xf32, #tpu.memory_space<vmem>>, vector<1x8x4xf32>
    %66 = vector.shape_cast %65 : vector<1x8x4xf32> to vector<8x4xf32>
    %cst_35 = arith.constant dense<0.000000e+00> : vector<8x512xf32>
    %67 = tpu.matmul %66, %64, %cst_35 {dimension_numbers = #tpu.dot_dimension_numbers<[1], [0], [0], [1], [0, 0, 1, 1], [], []>} : vector<8x4xf32>, vector<4x512xf32>, vector<8x512xf32> -> vector<8x512xf32>
    %68 = arith.addf %59, %67 : vector<8x512xf32>
    %69 = vector.extract_strided_slice %6 {offsets = [0, 143], sizes = [4, 512], strides = [1, 1]} : vector<4x768xf32> to vector<4x512xf32>
    %c240_i32 = arith.constant 240 : i32
    %70 = vector.broadcast %c240_i32 : i32 to vector<4x512xi32>
    %71 = arith.cmpi slt, %9, %70 : vector<4x512xi32>
    %c1_i32_36 = arith.constant 1 : i32
    %72 = vector.broadcast %c1_i32_36 : i32 to vector<4x512xi32>
    %73 = arith.cmpi sge, %11, %72 : vector<4x512xi32>
    %74 = arith.andi %71, %73 : vector<4x512xi1>
    %cst_37 = arith.constant 0.000000e+00 : f32
    %75 = vector.broadcast %cst_37 : f32 to vector<4x512xf32>
    %76 = arith.select %74, %69, %75 : vector<4x512xi1>, vector<4x512xf32>
    %c6 = arith.constant 6 : index
    %c0_38 = arith.constant 0 : index
    %c0_39 = arith.constant 0 : index
    %77 = vector.load %arg1[%c6, %c0_38, %c0_39] : memref<9x8x4xf32, #tpu.memory_space<vmem>>, vector<1x8x4xf32>
    %78 = vector.shape_cast %77 : vector<1x8x4xf32> to vector<8x4xf32>
    %cst_40 = arith.constant dense<0.000000e+00> : vector<8x512xf32>
    %79 = tpu.matmul %78, %76, %cst_40 {dimension_numbers = #tpu.dot_dimension_numbers<[1], [0], [0], [1], [0, 0, 1, 1], [], []>} : vector<8x4xf32>, vector<4x512xf32>, vector<8x512xf32> -> vector<8x512xf32>
    %80 = arith.addf %68, %79 : vector<8x512xf32>
    %81 = vector.extract_strided_slice %6 {offsets = [0, 144], sizes = [4, 512], strides = [1, 1]} : vector<4x768xf32> to vector<4x512xf32>
    %c240_i32_41 = arith.constant 240 : i32
    %82 = vector.broadcast %c240_i32_41 : i32 to vector<4x512xi32>
    %83 = arith.cmpi slt, %9, %82 : vector<4x512xi32>
    %cst_42 = arith.constant 0.000000e+00 : f32
    %84 = vector.broadcast %cst_42 : f32 to vector<4x512xf32>
    %85 = arith.select %83, %81, %84 : vector<4x512xi1>, vector<4x512xf32>
    %c7 = arith.constant 7 : index
    %c0_43 = arith.constant 0 : index
    %c0_44 = arith.constant 0 : index
    %86 = vector.load %arg1[%c7, %c0_43, %c0_44] : memref<9x8x4xf32, #tpu.memory_space<vmem>>, vector<1x8x4xf32>
    %87 = vector.shape_cast %86 : vector<1x8x4xf32> to vector<8x4xf32>
    %cst_45 = arith.constant dense<0.000000e+00> : vector<8x512xf32>
    %88 = tpu.matmul %87, %85, %cst_45 {dimension_numbers = #tpu.dot_dimension_numbers<[1], [0], [0], [1], [0, 0, 1, 1], [], []>} : vector<8x4xf32>, vector<4x512xf32>, vector<8x512xf32> -> vector<8x512xf32>
    %89 = arith.addf %80, %88 : vector<8x512xf32>
    %90 = vector.extract_strided_slice %6 {offsets = [0, 145], sizes = [4, 512], strides = [1, 1]} : vector<4x768xf32> to vector<4x512xf32>
    %c240_i32_46 = arith.constant 240 : i32
    %91 = vector.broadcast %c240_i32_46 : i32 to vector<4x512xi32>
    %92 = arith.cmpi slt, %9, %91 : vector<4x512xi32>
    %c15_i32_47 = arith.constant 15 : i32
    %93 = vector.broadcast %c15_i32_47 : i32 to vector<4x512xi32>
    %94 = arith.cmpi slt, %11, %93 : vector<4x512xi32>
    %95 = arith.andi %92, %94 : vector<4x512xi1>
    %cst_48 = arith.constant 0.000000e+00 : f32
    %96 = vector.broadcast %cst_48 : f32 to vector<4x512xf32>
    %97 = arith.select %95, %90, %96 : vector<4x512xi1>, vector<4x512xf32>
    %c8 = arith.constant 8 : index
    %c0_49 = arith.constant 0 : index
    %c0_50 = arith.constant 0 : index
    %98 = vector.load %arg1[%c8, %c0_49, %c0_50] : memref<9x8x4xf32, #tpu.memory_space<vmem>>, vector<1x8x4xf32>
    %99 = vector.shape_cast %98 : vector<1x8x4xf32> to vector<8x4xf32>
    %cst_51 = arith.constant dense<0.000000e+00> : vector<8x512xf32>
    %100 = tpu.matmul %99, %97, %cst_51 {dimension_numbers = #tpu.dot_dimension_numbers<[1], [0], [0], [1], [0, 0, 1, 1], [], []>} : vector<8x4xf32>, vector<4x512xf32>, vector<8x512xf32> -> vector<8x512xf32>
    %101 = arith.addf %89, %100 : vector<8x512xf32>
    %cst_52 = arith.constant dense<0.000000e+00> : vector<8xf32>
    %102 = vector.multi_reduction <add>, %101, %cst_52 [1] : vector<8x512xf32> to vector<8xf32>
    %103 = vector.shape_cast %102 : vector<8xf32> to vector<8x1xf32>
    %104 = arith.mulf %101, %101 : vector<8x512xf32>
    %cst_53 = arith.constant dense<0.000000e+00> : vector<8xf32>
    %105 = vector.multi_reduction <add>, %104, %cst_53 [1] : vector<8x512xf32> to vector<8xf32>
    %106 = vector.shape_cast %105 : vector<8xf32> to vector<8x1xf32>
    %cst_54 = arith.constant 0.001953125 : f32
    %107 = vector.broadcast %cst_54 : f32 to vector<8x1xf32>
    %108 = arith.mulf %103, %107 : vector<8x1xf32>
    %cst_55 = arith.constant 0.001953125 : f32
    %109 = vector.broadcast %cst_55 : f32 to vector<8x1xf32>
    %110 = arith.mulf %106, %109 : vector<8x1xf32>
    %111 = arith.mulf %108, %108 : vector<8x1xf32>
    %112 = arith.subf %110, %111 : vector<8x1xf32>
    %cst_56 = arith.constant 0.000000e+00 : f32
    %113 = vector.broadcast %cst_56 : f32 to vector<8x1xf32>
    %114 = arith.maximumf %112, %113 : vector<8x1xf32>
    %c0_57 = arith.constant 0 : index
    %c0_58 = arith.constant 0 : index
    %115 = vector.load %arg2[%c0_57, %c0_58] : memref<8x2xf32, #tpu.memory_space<vmem>>, vector<8x1xf32>
    %c0_59 = arith.constant 0 : index
    %c1_60 = arith.constant 1 : index
    %116 = vector.load %arg2[%c0_59, %c1_60] : memref<8x2xf32, #tpu.memory_space<vmem>>, vector<8x1xf32>
    %cst_61 = arith.constant 9.99999974E-6 : f32
    %117 = vector.broadcast %cst_61 : f32 to vector<8x1xf32>
    %118 = arith.addf %114, %117 : vector<8x1xf32>
    %119 = math.rsqrt %118 : vector<8x1xf32>
    %120 = arith.mulf %115, %119 : vector<8x1xf32>
    %121 = arith.mulf %108, %120 : vector<8x1xf32>
    %122 = arith.subf %116, %121 : vector<8x1xf32>
    %123 = vector.broadcast %120 : vector<8x1xf32> to vector<8x512xf32>
    %124 = arith.mulf %101, %123 : vector<8x512xf32>
    %125 = vector.broadcast %122 : vector<8x1xf32> to vector<8x512xf32>
    %126 = arith.addf %124, %125 : vector<8x512xf32>
    %cst_62 = arith.constant 0.000000e+00 : f32
    %127 = vector.broadcast %cst_62 : f32 to vector<8x512xf32>
    %128 = arith.maximumf %126, %127 : vector<8x512xf32>
    %129 = vector.extract_strided_slice %128 {offsets = [0, 0], sizes = [8, 256], strides = [1, 1]} : vector<8x512xf32> to vector<8x256xf32>
    %c0_63 = arith.constant 0 : index
    %c0_64 = arith.constant 0 : index
    %c0_65 = arith.constant 0 : index
    %130 = vector.load %arg3[%c0_63, %c0_64, %c0_65] : memref<2x8x256xf32, #tpu.memory_space<vmem>>, vector<1x8x256xf32>
    %131 = vector.shape_cast %130 : vector<1x8x256xf32> to vector<8x256xf32>
    %132 = vector.shape_cast %129 : vector<8x256xf32> to vector<1x8x256xf32>
    tpu.vector_store %arg3[%c0_63, %c0_64, %c0_65], %132 {strides = array<i32>} : memref<2x8x256xf32, #tpu.memory_space<vmem>>, vector<1x8x256xf32>,
    %133 = vector.extract_strided_slice %128 {offsets = [0, 256], sizes = [8, 256], strides = [1, 1]} : vector<8x512xf32> to vector<8x256xf32>
    %c1_66 = arith.constant 1 : index
    %c0_67 = arith.constant 0 : index
    %c0_68 = arith.constant 0 : index
    %134 = vector.load %arg3[%c1_66, %c0_67, %c0_68] : memref<2x8x256xf32, #tpu.memory_space<vmem>>, vector<1x8x256xf32>
    %135 = vector.shape_cast %134 : vector<1x8x256xf32> to vector<8x256xf32>
    %136 = vector.shape_cast %133 : vector<8x256xf32> to vector<1x8x256xf32>
    tpu.vector_store %arg3[%c1_66, %c0_67, %c0_68], %136 {strides = array<i32>} : memref<2x8x256xf32, #tpu.memory_space<vmem>>, vector<1x8x256xf32>,
    return
  }
}

</mosaic_0001>

<llo_original>
// kernel: tpu_custom_call.1
$region0: #{tpu_custom_call.1}
  #allocation0 [shape = 'u32[]', space=smem, size = 0x4, offset = 0x4, fixed_abs, tag = 'smem constant byte address 0x4 - core index']
  #allocation1 [shape = 'u32[144,128]{1,0:T(1,128)}', space=vmem, size = 0x12000, scoped, tag = 'internal scratch']
  %s0 = inlined_call_operand.vmem [shape: f32[2,4,256], index: 0, kind: input, shape index: {}]
  %s1 = inlined_call_operand.vmem [shape: f32[9,8,4], index: 1, kind: input, shape index: {}]
  %s2 = inlined_call_operand.vmem [shape: f32[8,2], index: 2, kind: input, shape index: {}]
  %s3 = inlined_call_operand.hbm [shape: f32[2,8,256], index: 3, kind: output, shape index: {}]
  %s4 = sld [smem:[#allocation0]]
  $region22: #{tpu_custom_call.1} parent=0
    _
  %s6 = ssub.s32 1, %s4
  %s7 = scalar_select 0, %s6, %s4
  $region1: #{tpu_custom_call.1} parent=0
    #allocation2 [shape = 'u8[16384]{0}', space=vmem, size = 0x4000, scoped, tag = 'output window, operand 0, single buffered']
    #allocation3 [shape = 's32[1]{0}', space=sflag, size = 0x4, scoped, tag = 'scoped memory for tpu_custom_call.1']
    %8 = vsyncpa [#allocation3], 0
    // Predicated region
    $region2: #{tpu_custom_call.1} parent=1 // pred_check
      _
    $region3: #{tpu_custom_call.1} parent=1 // pred_check_branch
      %10 = sbr.rel (0) target = $region5
    $region4: #{tpu_custom_call.1} parent=1 // pred_region
      _
    $region5: #{tpu_custom_call.1} parent=1 // pred_fallthru
      _
    // Predicated region
    $region6: #{tpu_custom_call.1} parent=1 // pred_check
      _
    $region7: #{tpu_custom_call.1} parent=1 // pred_check_branch
      %12 = sbr.rel (0) target = $region9
    $region8: #{tpu_custom_call.1} parent=1 // pred_region
      _
    $region9: #{tpu_custom_call.1} parent=1 // pred_fallthru
      _
    // Predicated region
    $region10: #{tpu_custom_call.1} parent=1 // pred_check
      _
    $region11: #{tpu_custom_call.1} parent=1 // pred_check_branch
      %14 = sbr.rel (0) target = $region13
    $region12: #{tpu_custom_call.1} parent=1 // pred_region
      _
    $region13: #{tpu_custom_call.1} parent=1 // pred_fallthru
      _
    %v15 = vld [vmem:[%s0] sm:$0xff]
    %s16 = scalar_lea.vmem %s0, 8
    %v17 = vld [vmem:[%s16] sm:$0xff]
    %v19 = vcombine.high %v15, %v15
    %v21 = vcombine.high %v17, %v17
    %v22 = vlaneseq
    %v23 = vand.u32 %v22, 127
    %v24 = vadd.s32 %v23, 128
    %v25 = vadd.s32 %v23, 256
    %v26 = vadd.s32 %v23, 384
    %v27 = vand.u32 %v23, 255
    %v28 = vand.u32 %v24, 255
    %v29 = vand.u32 %v25, 255
    %v30 = vand.u32 %v26, 255
    %v31 = vand.u32 %v23, 15
    %v32 = vand.u32 %v24, 15
    %v33 = vand.u32 %v25, 15
    %v34 = vand.u32 %v26, 15
    %vm35 = vcmp.ge.s32.totalorder %v27, 16
    %vm36 = vcmp.ge.s32.totalorder %v28, 16
    %vm37 = vcmp.ge.s32.totalorder %v29, 16
    %vm38 = vcmp.ge.s32.totalorder %v30, 16
    %vm39 = vcmp.ge.s32.totalorder %v31, 1
    %vm40 = vcmp.ge.s32.totalorder %v32, 1
    %vm41 = vcmp.ge.s32.totalorder %v33, 1
    %vm42 = vcmp.ge.s32.totalorder %v34, 1
    %vm43 = vmand %vm35, %vm39
    %vm44 = vmand %vm36, %vm40
    %vm45 = vmand %vm37, %vm41
    %vm46 = vmand %vm38, %vm42
    %48 = vrot.lane.b32.xlu0 0.0, 17
    %v49 = vpop.permute.xlu0 %48
    %50 = vrot.lane.b32.xlu0 %v15, 17
    %v51 = vpop.permute.xlu0 %50
    %52 = vrot.lane.b32.xlu0 %v19, 17
    %v53 = vpop.permute.xlu0 %52
    %54 = vrot.lane.b32.xlu0 %v17, 17
    %v55 = vpop.permute.xlu0 %54
    %56 = vrot.lane.b32.xlu0 %v21, 17
    %v57 = vpop.permute.xlu0 %56
    %vm58 = vcmask 138240
    %v59 = vsel %vm58, %v49, %v51
    %v60 = vsel %vm58, %v51, %v53
    %v61 = vsel %vm58, %v53, %v55
    %v62 = vsel %vm58, %v55, %v57
    %v67 = vsel %vm43, %v59, 0.0
    %v68 = vsel %vm44, %v60, 0.0
    %v69 = vsel %vm45, %v61, 0.0
    %v70 = vsel %vm46, %v62, 0.0
    %v71 = vld [vmem:[%s1] sm:$0xff]
    %72 = vrot.lane.b32.xlu0 0.0, 16
    %v73 = vpop.permute.xlu0 %72
    %74 = vrot.lane.b32.xlu0 %v15, 16
    %v75 = vpop.permute.xlu0 %74
    %76 = vrot.lane.b32.xlu0 %v19, 16
    %v77 = vpop.permute.xlu0 %76
    %78 = vrot.lane.b32.xlu0 %v17, 16
    %v79 = vpop.permute.xlu0 %78
    %80 = vrot.lane.b32.xlu0 %v21, 16
    %v81 = vpop.permute.xlu0 %80
    %vm82 = vcmask 130048
    %v83 = vsel %vm82, %v73, %v75
    %v84 = vsel %vm82, %v75, %v77
    %v85 = vsel %vm82, %v77, %v79
    %v86 = vsel %vm82, %v79, %v81
    %v91 = vsel %vm35, %v83, 0.0
    %v92 = vsel %vm36, %v84, 0.0
    %v93 = vsel %vm37, %v85, 0.0
    %v94 = vsel %vm38, %v86, 0.0
    %s95 = scalar_lea.vmem %s1, 8
    %v96 = vld [vmem:[%s95] sm:$0xff]
    %vm97 = vcmask 31744
    %v99 = vsel %vm97, %v96, 0
    %vm101 = vcmask 1043456
    %v103 = vsel %vm101, %v91, 0
    %v106 = vsel %vm101, %v92, 0
    %v109 = vsel %vm101, %v93, 0
    %v112 = vsel %vm101, %v94, 0
    %114 = vmatprep.subr.mxu0 0.0
    %115 = vmatpush1.msra.mxu0 0.0
    %116 = vmatprep.subr.mxu0 0.0
    %117 = vmatpush1.msra.mxu0 0.0
    %118 = vmatprep.subr.mxu0 0.0
    %119 = vmatpush1.msra.mxu0 0.0
    %120 = vmatprep.subr.mxu0 0.0
    %121 = vmatpush1.msra.mxu0 0.0
    %122 = vmatprep.subr.mxu0 0.0
    %123 = vmatpush1.msra.mxu0 0.0
    %124 = vmatprep.subr.mxu0 0.0
    %125 = vmatpush1.msra.mxu0 0.0
    %126 = vmatprep.subr.mxu0 0.0
    %127 = vmatpush1.msra.mxu0 0.0
    %128 = vmatprep.subr.mxu0 0.0
    %129 = vmatpush1.msra.mxu0 0.0
    %130 = vmatprep.subr.mxu0 0.0
    %131 = vmatpush1.msra.mxu0 0.0
    %132 = vmatprep.subr.mxu0 0.0
    %133 = vmatpush1.msra.mxu0 0.0
    %134 = vmatprep.subr.mxu0 0.0
    %135 = vmatpush1.msra.mxu0 0.0
    %136 = vmatprep.subr.mxu0 0.0
    %137 = vmatpush1.msra.mxu0 0.0
    %138 = vmatprep.subr.mxu0 0.0
    %139 = vmatpush1.msra.mxu0 0.0
    %140 = vmatprep.subr.mxu0 0.0
    %141 = vmatpush1.msra.mxu0 0.0
    %142 = vmatprep.subr.mxu0 0.0
    %143 = vmatpush1.msra.mxu0 0.0
    %144 = vmatprep.subr.mxu0 %v106
    %145 = vmatpush1.msra.mxu0 %v103
    %146 = vmatprep.subr.mxu0 0.0
    %147 = vmatpush2.msra.mxu0 0.0
    %148 = vmatprep.subr.mxu0 0.0
    %149 = vmatpush2.msra.mxu0 0.0
    %150 = vmatprep.subr.mxu0 0.0
    %151 = vmatpush2.msra.mxu0 0.0
    %152 = vmatprep.subr.mxu0 0.0
    %153 = vmatpush2.msra.mxu0 0.0
    %154 = vmatprep.subr.mxu0 0.0
    %155 = vmatpush2.msra.mxu0 0.0
    %156 = vmatprep.subr.mxu0 0.0
    %157 = vmatpush2.msra.mxu0 0.0
    %158 = vmatprep.subr.mxu0 0.0
    %159 = vmatpush2.msra.mxu0 0.0
    %160 = vmatprep.subr.mxu0 0.0
    %161 = vmatpush2.msra.mxu0 0.0
    %162 = vmatprep.subr.mxu0 0.0
    %163 = vmatpush2.msra.mxu0 0.0
    %164 = vmatprep.subr.mxu0 0.0
    %165 = vmatpush2.msra.mxu0 0.0
    %166 = vmatprep.subr.mxu0 0.0
    %167 = vmatpush2.msra.mxu0 0.0
    %168 = vmatprep.subr.mxu0 0.0
    %169 = vmatpush2.msra.mxu0 0.0
    %170 = vmatprep.subr.mxu0 0.0
    %171 = vmatpush2.msra.mxu0 0.0
    %172 = vmatprep.subr.mxu0 0.0
    %173 = vmatpush2.msra.mxu0 0.0
    %174 = vmatprep.subr.mxu0 0.0
    %175 = vmatpush2.msra.mxu0 0.0
    %176 = vmatprep.subr.mxu0 0.0
    %177 = vmatpush2.msra.mxu0 0.0
    %178 = vmatprep.mubr.f32.mxu0 0.0
    %179 = vmatmul.mubr.f32.gmra.mxu0 %v99
    %v180 = vpop.f32.mrf.mxu0
    %v181 = vadd.f32 0.0, %v180
    %v182 = vpop.f32.mrf.mxu0
    %v183 = vadd.f32 0.0, %v182
    %184 = vdwg.mxu0
    %185 = vmatprep.subr.mxu0 0.0
    %186 = vmatpush1.msra.mxu0 0.0
    %187 = vmatprep.subr.mxu0 0.0
    %188 = vmatpush1.msra.mxu0 0.0
    %189 = vmatprep.subr.mxu0 0.0
    %190 = vmatpush1.msra.mxu0 0.0
    %191 = vmatprep.subr.mxu0 0.0
    %192 = vmatpush1.msra.mxu0 0.0
    %193 = vmatprep.subr.mxu0 0.0
    %194 = vmatpush1.msra.mxu0 0.0
    %195 = vmatprep.subr.mxu0 0.0
    %196 = vmatpush1.msra.mxu0 0.0
    %197 = vmatprep.subr.mxu0 0.0
    %198 = vmatpush1.msra.mxu0 0.0
    %199 = vmatprep.subr.mxu0 0.0
    %200 = vmatpush1.msra.mxu0 0.0
    %201 = vmatprep.subr.mxu0 0.0
    %202 = vmatpush1.msra.mxu0 0.0
    %203 = vmatprep.subr.mxu0 0.0
    %204 = vmatpush1.msra.mxu0 0.0
    %205 = vmatprep.subr.mxu0 0.0
    %206 = vmatpush1.msra.mxu0 0.0
    %207 = vmatprep.subr.mxu0 0.0
    %208 = vmatpush1.msra.mxu0 0.0
    %209 = vmatprep.subr.mxu0 0.0
    %210 = vmatpush1.msra.mxu0 0.0
    %211 = vmatprep.subr.mxu0 0.0
    %212 = vmatpush1.msra.mxu0 0.0
    %213 = vmatprep.subr.mxu0 0.0
    %214 = vmatpush1.msra.mxu0 0.0
    %215 = vmatprep.subr.mxu0 %v112
    %216 = vmatpush1.msra.mxu0 %v109
    %217 = vmatprep.subr.mxu0 0.0
    %218 = vmatpush2.msra.mxu0 0.0
    %219 = vmatprep.subr.mxu0 0.0
    %220 = vmatpush2.msra.mxu0 0.0
    %221 = vmatprep.subr.mxu0 0.0
    %222 = vmatpush2.msra.mxu0 0.0
    %223 = vmatprep.subr.mxu0 0.0
    %224 = vmatpush2.msra.mxu0 0.0
    %225 = vmatprep.subr.mxu0 0.0
    %226 = vmatpush2.msra.mxu0 0.0
    %227 = vmatprep.subr.mxu0 0.0
    %228 = vmatpush2.msra.mxu0 0.0
    %229 = vmatprep.subr.mxu0 0.0
    %230 = vmatpush2.msra.mxu0 0.0
    %231 = vmatprep.subr.mxu0 0.0
    %232 = vmatpush2.msra.mxu0 0.0
    %233 = vmatprep.subr.mxu0 0.0
    %234 = vmatpush2.msra.mxu0 0.0
    %235 = vmatprep.subr.mxu0 0.0
    %236 = vmatpush2.msra.mxu0 0.0
    %237 = vmatprep.subr.mxu0 0.0
    %238 = vmatpush2.msra.mxu0 0.0
    %239 = vmatprep.subr.mxu0 0.0
    %240 = vmatpush2.msra.mxu0 0.0
    %241 = vmatprep.subr.mxu0 0.0
    %242 = vmatpush2.msra.mxu0 0.0
    %243 = vmatprep.subr.mxu0 0.0
    %244 = vmatpush2.msra.mxu0 0.0
    %245 = vmatprep.subr.mxu0 0.0
    %246 = vmatpush2.msra.mxu0 0.0
    %247 = vmatprep.subr.mxu0 0.0
    %248 = vmatpush2.msra.mxu0 0.0
    %249 = vmatprep.mubr.f32.mxu0 0.0
    %250 = vmatmul.mubr.f32.gmra.mxu0 %v99
    %v251 = vpop.f32.mrf.mxu0
    %v252 = vadd.f32 0.0, %v251
    %v253 = vpop.f32.mrf.mxu0
    %v254 = vadd.f32 0.0, %v253
    %255 = vdwg.mxu0
    %v257 = vsel %vm97, %v71, 0
    %v260 = vsel %vm101, %v67, 0
    %v263 = vsel %vm101, %v68, 0
    %v266 = vsel %vm101, %v69, 0
    %v269 = vsel %vm101, %v70, 0
    %271 = vmatprep.subr.mxu0 0.0
    %272 = vmatpush1.msra.mxu0 0.0
    %273 = vmatprep.subr.mxu0 0.0
    %274 = vmatpush1.msra.mxu0 0.0
    %275 = vmatprep.subr.mxu0 0.0
    %276 = vmatpush1.msra.mxu0 0.0
    %277 = vmatprep.subr.mxu0 0.0
    %278 = vmatpush1.msra.mxu0 0.0
    %279 = vmatprep.subr.mxu0 0.0
    %280 = vmatpush1.msra.mxu0 0.0
    %281 = vmatprep.subr.mxu0 0.0
    %282 = vmatpush1.msra.mxu0 0.0
    %283 = vmatprep.subr.mxu0 0.0
    %284 = vmatpush1.msra.mxu0 0.0
    %285 = vmatprep.subr.mxu0 0.0
    %286 = vmatpush1.msra.mxu0 0.0
    %287 = vmatprep.subr.mxu0 0.0
    %288 = vmatpush1.msra.mxu0 0.0
    %289 = vmatprep.subr.mxu0 0.0
    %290 = vmatpush1.msra.mxu0 0.0
    %291 = vmatprep.subr.mxu0 0.0
    %292 = vmatpush1.msra.mxu0 0.0
    %293 = vmatprep.subr.mxu0 0.0
    %294 = vmatpush1.msra.mxu0 0.0
    %295 = vmatprep.subr.mxu0 0.0
    %296 = vmatpush1.msra.mxu0 0.0
    %297 = vmatprep.subr.mxu0 0.0
    %298 = vmatpush1.msra.mxu0 0.0
    %299 = vmatprep.subr.mxu0 0.0
    %300 = vmatpush1.msra.mxu0 0.0
    %301 = vmatprep.subr.mxu0 %v263
    %302 = vmatpush1.msra.mxu0 %v260
    %303 = vmatprep.subr.mxu0 0.0
    %304 = vmatpush2.msra.mxu0 0.0
    %305 = vmatprep.subr.mxu0 0.0
    %306 = vmatpush2.msra.mxu0 0.0
    %307 = vmatprep.subr.mxu0 0.0
    %308 = vmatpush2.msra.mxu0 0.0
    %309 = vmatprep.subr.mxu0 0.0
    %310 = vmatpush2.msra.mxu0 0.0
    %311 = vmatprep.subr.mxu0 0.0
    %312 = vmatpush2.msra.mxu0 0.0
    %313 = vmatprep.subr.mxu0 0.0
    %314 = vmatpush2.msra.mxu0 0.0
    %315 = vmatprep.subr.mxu0 0.0
    %316 = vmatpush2.msra.mxu0 0.0
    %317 = vmatprep.subr.mxu0 0.0
    %318 = vmatpush2.msra.mxu0 0.0
    %319 = vmatprep.subr.mxu0 0.0
    %320 = vmatpush2.msra.mxu0 0.0
    %321 = vmatprep.subr.mxu0 0.0
    %322 = vmatpush2.msra.mxu0 0.0
    %323 = vmatprep.subr.mxu0 0.0
    %324 = vmatpush2.msra.mxu0 0.0
    %325 = vmatprep.subr.mxu0 0.0
    %326 = vmatpush2.msra.mxu0 0.0
    %327 = vmatprep.subr.mxu0 0.0
    %328 = vmatpush2.msra.mxu0 0.0
    %329 = vmatprep.subr.mxu0 0.0
    %330 = vmatpush2.msra.mxu0 0.0
    %331 = vmatprep.subr.mxu0 0.0
    %332 = vmatpush2.msra.mxu0 0.0
    %333 = vmatprep.subr.mxu0 0.0
    %334 = vmatpush2.msra.mxu0 0.0
    %335 = vmatprep.mubr.f32.mxu0 0.0
    %336 = vmatmul.mubr.f32.gmra.mxu0 %v257
    %v337 = vpop.f32.mrf.mxu0
    %v338 = vadd.f32 %v181, %v337
    %v339 = vpop.f32.mrf.mxu0
    %v340 = vadd.f32 %v183, %v339
    %341 = vdwg.mxu0
    %342 = vmatprep.subr.mxu0 0.0
    %343 = vmatpush1.msra.mxu0 0.0
    %344 = vmatprep.subr.mxu0 0.0
    %345 = vmatpush1.msra.mxu0 0.0
    %346 = vmatprep.subr.mxu0 0.0
    %347 = vmatpush1.msra.mxu0 0.0
    %348 = vmatprep.subr.mxu0 0.0
    %349 = vmatpush1.msra.mxu0 0.0
    %350 = vmatprep.subr.mxu0 0.0
    %351 = vmatpush1.msra.mxu0 0.0
    %352 = vmatprep.subr.mxu0 0.0
    %353 = vmatpush1.msra.mxu0 0.0
    %354 = vmatprep.subr.mxu0 0.0
    %355 = vmatpush1.msra.mxu0 0.0
    %356 = vmatprep.subr.mxu0 0.0
    %357 = vmatpush1.msra.mxu0 0.0
    %358 = vmatprep.subr.mxu0 0.0
    %359 = vmatpush1.msra.mxu0 0.0
    %360 = vmatprep.subr.mxu0 0.0
    %361 = vmatpush1.msra.mxu0 0.0
    %362 = vmatprep.subr.mxu0 0.0
    %363 = vmatpush1.msra.mxu0 0.0
    %364 = vmatprep.subr.mxu0 0.0
    %365 = vmatpush1.msra.mxu0 0.0
    %366 = vmatprep.subr.mxu0 0.0
    %367 = vmatpush1.msra.mxu0 0.0
    %368 = vmatprep.subr.mxu0 0.0
    %369 = vmatpush1.msra.mxu0 0.0
    %370 = vmatprep.subr.mxu0 0.0
    %371 = vmatpush1.msra.mxu0 0.0
    %372 = vmatprep.subr.mxu0 %v269
    %373 = vmatpush1.msra.mxu0 %v266
    %374 = vmatprep.subr.mxu0 0.0
    %375 = vmatpush2.msra.mxu0 0.0
    %376 = vmatprep.subr.mxu0 0.0
    %377 = vmatpush2.msra.mxu0 0.0
    %378 = vmatprep.subr.mxu0 0.0
    %379 = vmatpush2.msra.mxu0 0.0
    %380 = vmatprep.subr.mxu0 0.0
    %381 = vmatpush2.msra.mxu0 0.0
    %382 = vmatprep.subr.mxu0 0.0
    %383 = vmatpush2.msra.mxu0 0.0
    %384 = vmatprep.subr.mxu0 0.0
    %385 = vmatpush2.msra.mxu0 0.0
    %386 = vmatprep.subr.mxu0 0.0
    %387 = vmatpush2.msra.mxu0 0.0
    %388 = vmatprep.subr.mxu0 0.0
    %389 = vmatpush2.msra.mxu0 0.0
    %390 = vmatprep.subr.mxu0 0.0
    %391 = vmatpush2.msra.mxu0 0.0
    %392 = vmatprep.subr.mxu0 0.0
    %393 = vmatpush2.msra.mxu0 0.0
    %394 = vmatprep.subr.mxu0 0.0
    %395 = vmatpush2.msra.mxu0 0.0
    %396 = vmatprep.subr.mxu0 0.0
    %397 = vmatpush2.msra.mxu0 0.0
    %398 = vmatprep.subr.mxu0 0.0
    %399 = vmatpush2.msra.mxu0 0.0
    %400 = vmatprep.subr.mxu0 0.0
    %401 = vmatpush2.msra.mxu0 0.0
    %402 = vmatprep.subr.mxu0 0.0
    %403 = vmatpush2.msra.mxu0 0.0
    %404 = vmatprep.subr.mxu0 0.0
    %405 = vmatpush2.msra.mxu0 0.0
    %406 = vmatprep.mubr.f32.mxu0 0.0
    %407 = vmatmul.mubr.f32.gmra.mxu0 %v257
    %v408 = vpop.f32.mrf.mxu0
    %v409 = vadd.f32 %v252, %v408
    %v410 = vpop.f32.mrf.mxu0
    %v411 = vadd.f32 %v254, %v410
    %412 = vdwg.mxu0
    %vm413 = vcmp.lt.s32.totalorder %v31, 15
    %vm414 = vcmp.lt.s32.totalorder %v32, 15
    %vm415 = vcmp.lt.s32.totalorder %v33, 15
    %vm416 = vcmp.lt.s32.totalorder %v34, 15
    %vm417 = vmand %vm35, %vm413
    %vm418 = vmand %vm36, %vm414
    %vm419 = vmand %vm37, %vm415
    %vm420 = vmand %vm38, %vm416
    %421 = vrot.lane.b32.xlu0 0.0, 15
    %v422 = vpop.permute.xlu0 %421
    %423 = vrot.lane.b32.xlu0 %v15, 15
    %v424 = vpop.permute.xlu0 %423
    %425 = vrot.lane.b32.xlu0 %v19, 15
    %v426 = vpop.permute.xlu0 %425
    %427 = vrot.lane.b32.xlu0 %v17, 15
    %v428 = vpop.permute.xlu0 %427
    %429 = vrot.lane.b32.xlu0 %v21, 15
    %v430 = vpop.permute.xlu0 %429
    %vm431 = vcmask 121856
    %v432 = vsel %vm431, %v422, %v424
    %v433 = vsel %vm431, %v424, %v426
    %v434 = vsel %vm431, %v426, %v428
    %v435 = vsel %vm431, %v428, %v430
    %v440 = vsel %vm417, %v432, 0.0
    %v441 = vsel %vm418, %v433, 0.0
    %v442 = vsel %vm419, %v434, 0.0
    %v443 = vsel %vm420, %v435, 0.0
    %s444 = scalar_lea.vmem %s1, 16
    %v445 = vld [vmem:[%s444] sm:$0xff]
    %v447 = vsel %vm97, %v445, 0
    %v450 = vsel %vm101, %v440, 0
    %v453 = vsel %vm101, %v441, 0
    %v456 = vsel %vm101, %v442, 0
    %v459 = vsel %vm101, %v443, 0
    %461 = vmatprep.subr.mxu0 0.0
    %462 = vmatpush1.msra.mxu0 0.0
    %463 = vmatprep.subr.mxu0 0.0
    %464 = vmatpush1.msra.mxu0 0.0
    %465 = vmatprep.subr.mxu0 0.0
    %466 = vmatpush1.msra.mxu0 0.0
    %467 = vmatprep.subr.mxu0 0.0
    %468 = vmatpush1.msra.mxu0 0.0
    %469 = vmatprep.subr.mxu0 0.0
    %470 = vmatpush1.msra.mxu0 0.0
    %471 = vmatprep.subr.mxu0 0.0
    %472 = vmatpush1.msra.mxu0 0.0
    %473 = vmatprep.subr.mxu0 0.0
    %474 = vmatpush1.msra.mxu0 0.0
    %475 = vmatprep.subr.mxu0 0.0
    %476 = vmatpush1.msra.mxu0 0.0
    %477 = vmatprep.subr.mxu0 0.0
    %478 = vmatpush1.msra.mxu0 0.0
    %479 = vmatprep.subr.mxu0 0.0
    %480 = vmatpush1.msra.mxu0 0.0
    %481 = vmatprep.subr.mxu0 0.0
    %482 = vmatpush1.msra.mxu0 0.0
    %483 = vmatprep.subr.mxu0 0.0
    %484 = vmatpush1.msra.mxu0 0.0
    %485 = vmatprep.subr.mxu0 0.0
    %486 = vmatpush1.msra.mxu0 0.0
    %487 = vmatprep.subr.mxu0 0.0
    %488 = vmatpush1.msra.mxu0 0.0
    %489 = vmatprep.subr.mxu0 0.0
    %490 = vmatpush1.msra.mxu0 0.0
    %491 = vmatprep.subr.mxu0 %v453
    %492 = vmatpush1.msra.mxu0 %v450
    %493 = vmatprep.subr.mxu0 0.0
    %494 = vmatpush2.msra.mxu0 0.0
    %495 = vmatprep.subr.mxu0 0.0
    %496 = vmatpush2.msra.mxu0 0.0
    %497 = vmatprep.subr.mxu0 0.0
    %498 = vmatpush2.msra.mxu0 0.0
    %499 = vmatprep.subr.mxu0 0.0
    %500 = vmatpush2.msra.mxu0 0.0
    %501 = vmatprep.subr.mxu0 0.0
    %502 = vmatpush2.msra.mxu0 0.0
    %503 = vmatprep.subr.mxu0 0.0
    %504 = vmatpush2.msra.mxu0 0.0
    %505 = vmatprep.subr.mxu0 0.0
    %506 = vmatpush2.msra.mxu0 0.0
    %507 = vmatprep.subr.mxu0 0.0
    %508 = vmatpush2.msra.mxu0 0.0
    %509 = vmatprep.subr.mxu0 0.0
    %510 = vmatpush2.msra.mxu0 0.0
    %511 = vmatprep.subr.mxu0 0.0
    %512 = vmatpush2.msra.mxu0 0.0
    %513 = vmatprep.subr.mxu0 0.0
    %514 = vmatpush2.msra.mxu0 0.0
    %515 = vmatprep.subr.mxu0 0.0
    %516 = vmatpush2.msra.mxu0 0.0
    %517 = vmatprep.subr.mxu0 0.0
    %518 = vmatpush2.msra.mxu0 0.0
    %519 = vmatprep.subr.mxu0 0.0
    %520 = vmatpush2.msra.mxu0 0.0
    %521 = vmatprep.subr.mxu0 0.0
    %522 = vmatpush2.msra.mxu0 0.0
    %523 = vmatprep.subr.mxu0 0.0
    %524 = vmatpush2.msra.mxu0 0.0
    %525 = vmatprep.mubr.f32.mxu0 0.0
    %526 = vmatmul.mubr.f32.gmra.mxu0 %v447
    %v527 = vpop.f32.mrf.mxu0
    %v528 = vadd.f32 0.0, %v527
    %v529 = vpop.f32.mrf.mxu0
    %v530 = vadd.f32 0.0, %v529
    %531 = vdwg.mxu0
    %532 = vmatprep.subr.mxu0 0.0
    %533 = vmatpush1.msra.mxu0 0.0
    %534 = vmatprep.subr.mxu0 0.0
    %535 = vmatpush1.msra.mxu0 0.0
    %536 = vmatprep.subr.mxu0 0.0
    %537 = vmatpush1.msra.mxu0 0.0
    %538 = vmatprep.subr.mxu0 0.0
    %539 = vmatpush1.msra.mxu0 0.0
    %540 = vmatprep.subr.mxu0 0.0
    %541 = vmatpush1.msra.mxu0 0.0
    %542 = vmatprep.subr.mxu0 0.0
    %543 = vmatpush1.msra.mxu0 0.0
    %544 = vmatprep.subr.mxu0 0.0
    %545 = vmatpush1.msra.mxu0 0.0
    %546 = vmatprep.subr.mxu0 0.0
    %547 = vmatpush1.msra.mxu0 0.0
    %548 = vmatprep.subr.mxu0 0.0
    %549 = vmatpush1.msra.mxu0 0.0
    %550 = vmatprep.subr.mxu0 0.0
    %551 = vmatpush1.msra.mxu0 0.0
    %552 = vmatprep.subr.mxu0 0.0
    %553 = vmatpush1.msra.mxu0 0.0
    %554 = vmatprep.subr.mxu0 0.0
    %555 = vmatpush1.msra.mxu0 0.0
    %556 = vmatprep.subr.mxu0 0.0
    %557 = vmatpush1.msra.mxu0 0.0
    %558 = vmatprep.subr.mxu0 0.0
    %559 = vmatpush1.msra.mxu0 0.0
    %560 = vmatprep.subr.mxu0 0.0
    %561 = vmatpush1.msra.mxu0 0.0
    %562 = vmatprep.subr.mxu0 %v459
    %563 = vmatpush1.msra.mxu0 %v456
    %564 = vmatprep.subr.mxu0 0.0
    %565 = vmatpush2.msra.mxu0 0.0
    %566 = vmatprep.subr.mxu0 0.0
    %567 = vmatpush2.msra.mxu0 0.0
    %568 = vmatprep.subr.mxu0 0.0
    %569 = vmatpush2.msra.mxu0 0.0
    %570 = vmatprep.subr.mxu0 0.0
    %571 = vmatpush2.msra.mxu0 0.0
    %572 = vmatprep.subr.mxu0 0.0
    %573 = vmatpush2.msra.mxu0 0.0
    %574 = vmatprep.subr.mxu0 0.0
    %575 = vmatpush2.msra.mxu0 0.0
    %576 = vmatprep.subr.mxu0 0.0
    %577 = vmatpush2.msra.mxu0 0.0
    %578 = vmatprep.subr.mxu0 0.0
    %579 = vmatpush2.msra.mxu0 0.0
    %580 = vmatprep.subr.mxu0 0.0
    %581 = vmatpush2.msra.mxu0 0.0
    %582 = vmatprep.subr.mxu0 0.0
    %583 = vmatpush2.msra.mxu0 0.0
    %584 = vmatprep.subr.mxu0 0.0
    %585 = vmatpush2.msra.mxu0 0.0
    %586 = vmatprep.subr.mxu0 0.0
    %587 = vmatpush2.msra.mxu0 0.0
    %588 = vmatprep.subr.mxu0 0.0
    %589 = vmatpush2.msra.mxu0 0.0
    %590 = vmatprep.subr.mxu0 0.0
    %591 = vmatpush2.msra.mxu0 0.0
    %592 = vmatprep.subr.mxu0 0.0
    %593 = vmatpush2.msra.mxu0 0.0
    %594 = vmatprep.subr.mxu0 0.0
    %595 = vmatpush2.msra.mxu0 0.0
    %596 = vmatprep.mubr.f32.mxu0 0.0
    %597 = vmatmul.mubr.f32.gmra.mxu0 %v447
    %v598 = vpop.f32.mrf.mxu0
    %v599 = vadd.f32 0.0, %v598
    %v600 = vpop.f32.mrf.mxu0
    %v601 = vadd.f32 0.0, %v600
    %602 = vdwg.mxu0
    %v603 = vadd.f32 %v338, %v528
    %v604 = vadd.f32 %v340, %v530
    %v605 = vadd.f32 %v409, %v599
    %v606 = vadd.f32 %v411, %v601
    %607 = vrot.lane.b32.xlu0 0.0, 1
    %v608 = vpop.permute.xlu0 %607
    %609 = vrot.lane.b32.xlu0 %v15, 1
    %v610 = vpop.permute.xlu0 %609
    %611 = vrot.lane.b32.xlu0 %v19, 1
    %v612 = vpop.permute.xlu0 %611
    %613 = vrot.lane.b32.xlu0 %v17, 1
    %v614 = vpop.permute.xlu0 %613
    %615 = vrot.lane.b32.xlu0 %v21, 1
    %v616 = vpop.permute.xlu0 %615
    %vm617 = vcmask 7168
    %v618 = vsel %vm617, %v608, %v610
    %v619 = vsel %vm617, %v610, %v612
    %v620 = vsel %vm617, %v612, %v614
    %v621 = vsel %vm617, %v614, %v616
    %v626 = vsel %vm39, %v618, 0.0
    %v627 = vsel %vm40, %v619, 0.0
    %v628 = vsel %vm41, %v620, 0.0
    %v629 = vsel %vm42, %v621, 0.0
    %s630 = scalar_lea.vmem %s1, 24
    %v631 = vld [vmem:[%s630] sm:$0xff]
    %v633 = vsel %vm97, %v631, 0
    %v636 = vsel %vm101, %v626, 0
    %v639 = vsel %vm101, %v627, 0
    %v642 = vsel %vm101, %v628, 0
    %v645 = vsel %vm101, %v629, 0
    %647 = vmatprep.subr.mxu0 0.0
    %648 = vmatpush1.msra.mxu0 0.0
    %649 = vmatprep.subr.mxu0 0.0
    %650 = vmatpush1.msra.mxu0 0.0
    %651 = vmatprep.subr.mxu0 0.0
    %652 = vmatpush1.msra.mxu0 0.0
    %653 = vmatprep.subr.mxu0 0.0
    %654 = vmatpush1.msra.mxu0 0.0
    %655 = vmatprep.subr.mxu0 0.0
    %656 = vmatpush1.msra.mxu0 0.0
    %657 = vmatprep.subr.mxu0 0.0
    %658 = vmatpush1.msra.mxu0 0.0
    %659 = vmatprep.subr.mxu0 0.0
    %660 = vmatpush1.msra.mxu0 0.0
    %661 = vmatprep.subr.mxu0 0.0
    %662 = vmatpush1.msra.mxu0 0.0
    %663 = vmatprep.subr.mxu0 0.0
    %664 = vmatpush1.msra.mxu0 0.0
    %665 = vmatprep.subr.mxu0 0.0
    %666 = vmatpush1.msra.mxu0 0.0
    %667 = vmatprep.subr.mxu0 0.0
    %668 = vmatpush1.msra.mxu0 0.0
    %669 = vmatprep.subr.mxu0 0.0
    %670 = vmatpush1.msra.mxu0 0.0
    %671 = vmatprep.subr.mxu0 0.0
    %672 = vmatpush1.msra.mxu0 0.0
    %673 = vmatprep.subr.mxu0 0.0
    %674 = vmatpush1.msra.mxu0 0.0
    %675 = vmatprep.subr.mxu0 0.0
    %676 = vmatpush1.msra.mxu0 0.0
    %677 = vmatprep.subr.mxu0 %v639
    %678 = vmatpush1.msra.mxu0 %v636
    %679 = vmatprep.subr.mxu0 0.0
    %680 = vmatpush2.msra.mxu0 0.0
    %681 = vmatprep.subr.mxu0 0.0
    %682 = vmatpush2.msra.mxu0 0.0
    %683 = vmatprep.subr.mxu0 0.0
    %684 = vmatpush2.msra.mxu0 0.0
    %685 = vmatprep.subr.mxu0 0.0
    %686 = vmatpush2.msra.mxu0 0.0
    %687 = vmatprep.subr.mxu0 0.0
    %688 = vmatpush2.msra.mxu0 0.0
    %689 = vmatprep.subr.mxu0 0.0
    %690 = vmatpush2.msra.mxu0 0.0
    %691 = vmatprep.subr.mxu0 0.0
    %692 = vmatpush2.msra.mxu0 0.0
    %693 = vmatprep.subr.mxu0 0.0
    %694 = vmatpush2.msra.mxu0 0.0
    %695 = vmatprep.subr.mxu0 0.0
    %696 = vmatpush2.msra.mxu0 0.0
    %697 = vmatprep.subr.mxu0 0.0
    %698 = vmatpush2.msra.mxu0 0.0
    %699 = vmatprep.subr.mxu0 0.0
    %700 = vmatpush2.msra.mxu0 0.0
    %701 = vmatprep.subr.mxu0 0.0
    %702 = vmatpush2.msra.mxu0 0.0
    %703 = vmatprep.subr.mxu0 0.0
    %704 = vmatpush2.msra.mxu0 0.0
    %705 = vmatprep.subr.mxu0 0.0
    %706 = vmatpush2.msra.mxu0 0.0
    %707 = vmatprep.subr.mxu0 0.0
    %708 = vmatpush2.msra.mxu0 0.0
    %709 = vmatprep.subr.mxu0 0.0
    %710 = vmatpush2.msra.mxu0 0.0
    %711 = vmatprep.mubr.f32.mxu0 0.0
    %712 = vmatmul.mubr.f32.gmra.mxu0 %v633
    %v713 = vpop.f32.mrf.mxu0
    %v714 = vadd.f32 0.0, %v713
    %v715 = vpop.f32.mrf.mxu0
    %v716 = vadd.f32 0.0, %v715
    %717 = vdwg.mxu0
    %718 = vmatprep.subr.mxu0 0.0
    %719 = vmatpush1.msra.mxu0 0.0
    %720 = vmatprep.subr.mxu0 0.0
    %721 = vmatpush1.msra.mxu0 0.0
    %722 = vmatprep.subr.mxu0 0.0
    %723 = vmatpush1.msra.mxu0 0.0
    %724 = vmatprep.subr.mxu0 0.0
    %725 = vmatpush1.msra.mxu0 0.0
    %726 = vmatprep.subr.mxu0 0.0
    %727 = vmatpush1.msra.mxu0 0.0
    %728 = vmatprep.subr.mxu0 0.0
    %729 = vmatpush1.msra.mxu0 0.0
    %730 = vmatprep.subr.mxu0 0.0
    %731 = vmatpush1.msra.mxu0 0.0
    %732 = vmatprep.subr.mxu0 0.0
    %733 = vmatpush1.msra.mxu0 0.0
    %734 = vmatprep.subr.mxu0 0.0
    %735 = vmatpush1.msra.mxu0 0.0
    %736 = vmatprep.subr.mxu0 0.0
    %737 = vmatpush1.msra.mxu0 0.0
    %738 = vmatprep.subr.mxu0 0.0
    %739 = vmatpush1.msra.mxu0 0.0
    %740 = vmatprep.subr.mxu0 0.0
    %741 = vmatpush1.msra.mxu0 0.0
    %742 = vmatprep.subr.mxu0 0.0
    %743 = vmatpush1.msra.mxu0 0.0
    %744 = vmatprep.subr.mxu0 0.0
    %745 = vmatpush1.msra.mxu0 0.0
    %746 = vmatprep.subr.mxu0 0.0
    %747 = vmatpush1.msra.mxu0 0.0
    %748 = vmatprep.subr.mxu0 %v645
    %749 = vmatpush1.msra.mxu0 %v642
    %750 = vmatprep.subr.mxu0 0.0
    %751 = vmatpush2.msra.mxu0 0.0
    %752 = vmatprep.subr.mxu0 0.0
    %753 = vmatpush2.msra.mxu0 0.0
    %754 = vmatprep.subr.mxu0 0.0
    %755 = vmatpush2.msra.mxu0 0.0
    %756 = vmatprep.subr.mxu0 0.0
    %757 = vmatpush2.msra.mxu0 0.0
    %758 = vmatprep.subr.mxu0 0.0
    %759 = vmatpush2.msra.mxu0 0.0
    %760 = vmatprep.subr.mxu0 0.0
    %761 = vmatpush2.msra.mxu0 0.0
    %762 = vmatprep.subr.mxu0 0.0
    %763 = vmatpush2.msra.mxu0 0.0
    %764 = vmatprep.subr.mxu0 0.0
    %765 = vmatpush2.msra.mxu0 0.0
    %766 = vmatprep.subr.mxu0 0.0
    %767 = vmatpush2.msra.mxu0 0.0
    %768 = vmatprep.subr.mxu0 0.0
    %769 = vmatpush2.msra.mxu0 0.0
    %770 = vmatprep.subr.mxu0 0.0
    %771 = vmatpush2.msra.mxu0 0.0
    %772 = vmatprep.subr.mxu0 0.0
    %773 = vmatpush2.msra.mxu0 0.0
    %774 = vmatprep.subr.mxu0 0.0
    %775 = vmatpush2.msra.mxu0 0.0
    %776 = vmatprep.subr.mxu0 0.0
    %777 = vmatpush2.msra.mxu0 0.0
    %778 = vmatprep.subr.mxu0 0.0
    %779 = vmatpush2.msra.mxu0 0.0
    %780 = vmatprep.subr.mxu0 0.0
    %781 = vmatpush2.msra.mxu0 0.0
    %782 = vmatprep.mubr.f32.mxu0 0.0
    %783 = vmatmul.mubr.f32.gmra.mxu0 %v633
    %v784 = vpop.f32.mrf.mxu0
    %v785 = vadd.f32 0.0, %v784
    %v786 = vpop.f32.mrf.mxu0
    %v787 = vadd.f32 0.0, %v786
    %788 = vdwg.mxu0
    %v789 = vadd.f32 %v603, %v714
    %v790 = vadd.f32 %v604, %v716
    %v791 = vadd.f32 %v605, %v785
    %v792 = vadd.f32 %v606, %v787
    %s793 = scalar_lea.vmem %s1, 32
    %v794 = vld [vmem:[%s793] sm:$0xff]
    %v796 = vsel %vm97, %v794, 0
    %v798 = vsel %vm101, %v15, 0
    %v800 = vsel %vm101, %v19, 0
    %v802 = vsel %vm101, %v17, 0
    %v804 = vsel %vm101, %v21, 0
    %806 = vmatprep.subr.mxu0 0.0
    %807 = vmatpush1.msra.mxu0 0.0
    %808 = vmatprep.subr.mxu0 0.0
    %809 = vmatpush1.msra.mxu0 0.0
    %810 = vmatprep.subr.mxu0 0.0
    %811 = vmatpush1.msra.mxu0 0.0
    %812 = vmatprep.subr.mxu0 0.0
    %813 = vmatpush1.msra.mxu0 0.0
    %814 = vmatprep.subr.mxu0 0.0
    %815 = vmatpush1.msra.mxu0 0.0
    %816 = vmatprep.subr.mxu0 0.0
    %817 = vmatpush1.msra.mxu0 0.0
    %818 = vmatprep.subr.mxu0 0.0
    %819 = vmatpush1.msra.mxu0 0.0
    %820 = vmatprep.subr.mxu0 0.0
    %821 = vmatpush1.msra.mxu0 0.0
    %822 = vmatprep.subr.mxu0 0.0
    %823 = vmatpush1.msra.mxu0 0.0
    %824 = vmatprep.subr.mxu0 0.0
    %825 = vmatpush1.msra.mxu0 0.0
    %826 = vmatprep.subr.mxu0 0.0
    %827 = vmatpush1.msra.mxu0 0.0
    %828 = vmatprep.subr.mxu0 0.0
    %829 = vmatpush1.msra.mxu0 0.0
    %830 = vmatprep.subr.mxu0 0.0
    %831 = vmatpush1.msra.mxu0 0.0
    %832 = vmatprep.subr.mxu0 0.0
    %833 = vmatpush1.msra.mxu0 0.0
    %834 = vmatprep.subr.mxu0 0.0
    %835 = vmatpush1.msra.mxu0 0.0
    %836 = vmatprep.subr.mxu0 %v800
    %837 = vmatpush1.msra.mxu0 %v798
    %838 = vmatprep.subr.mxu0 0.0
    %839 = vmatpush2.msra.mxu0 0.0
    %840 = vmatprep.subr.mxu0 0.0
    %841 = vmatpush2.msra.mxu0 0.0
    %842 = vmatprep.subr.mxu0 0.0
    %843 = vmatpush2.msra.mxu0 0.0
    %844 = vmatprep.subr.mxu0 0.0
    %845 = vmatpush2.msra.mxu0 0.0
    %846 = vmatprep.subr.mxu0 0.0
    %847 = vmatpush2.msra.mxu0 0.0
    %848 = vmatprep.subr.mxu0 0.0
    %849 = vmatpush2.msra.mxu0 0.0
    %850 = vmatprep.subr.mxu0 0.0
    %851 = vmatpush2.msra.mxu0 0.0
    %852 = vmatprep.subr.mxu0 0.0
    %853 = vmatpush2.msra.mxu0 0.0
    %854 = vmatprep.subr.mxu0 0.0
    %855 = vmatpush2.msra.mxu0 0.0
    %856 = vmatprep.subr.mxu0 0.0
    %857 = vmatpush2.msra.mxu0 0.0
    %858 = vmatprep.subr.mxu0 0.0
    %859 = vmatpush2.msra.mxu0 0.0
    %860 = vmatprep.subr.mxu0 0.0
    %861 = vmatpush2.msra.mxu0 0.0
    %862 = vmatprep.subr.mxu0 0.0
    %863 = vmatpush2.msra.mxu0 0.0
    %864 = vmatprep.subr.mxu0 0.0
    %865 = vmatpush2.msra.mxu0 0.0
    %866 = vmatprep.subr.mxu0 0.0
    %867 = vmatpush2.msra.mxu0 0.0
    %868 = vmatprep.subr.mxu0 0.0
    %869 = vmatpush2.msra.mxu0 0.0
    %870 = vmatprep.mubr.f32.mxu0 0.0
    %871 = vmatmul.mubr.f32.gmra.mxu0 %v796
    %v872 = vpop.f32.mrf.mxu0
    %v873 = vadd.f32 0.0, %v872
    %v874 = vpop.f32.mrf.mxu0
    %v875 = vadd.f32 0.0, %v874
    %876 = vdwg.mxu0
    %877 = vmatprep.subr.mxu0 0.0
    %878 = vmatpush1.msra.mxu0 0.0
    %879 = vmatprep.subr.mxu0 0.0
    %880 = vmatpush1.msra.mxu0 0.0
    %881 = vmatprep.subr.mxu0 0.0
    %882 = vmatpush1.msra.mxu0 0.0
    %883 = vmatprep.subr.mxu0 0.0
    %884 = vmatpush1.msra.mxu0 0.0
    %885 = vmatprep.subr.mxu0 0.0
    %886 = vmatpush1.msra.mxu0 0.0
    %887 = vmatprep.subr.mxu0 0.0
    %888 = vmatpush1.msra.mxu0 0.0
    %889 = vmatprep.subr.mxu0 0.0
    %890 = vmatpush1.msra.mxu0 0.0
    %891 = vmatprep.subr.mxu0 0.0
    %892 = vmatpush1.msra.mxu0 0.0
    %893 = vmatprep.subr.mxu0 0.0
    %894 = vmatpush1.msra.mxu0 0.0
    %895 = vmatprep.subr.mxu0 0.0
    %896 = vmatpush1.msra.mxu0 0.0
    %897 = vmatprep.subr.mxu0 0.0
    %898 = vmatpush1.msra.mxu0 0.0
    %899 = vmatprep.subr.mxu0 0.0
    %900 = vmatpush1.msra.mxu0 0.0
    %901 = vmatprep.subr.mxu0 0.0
    %902 = vmatpush1.msra.mxu0 0.0
    %903 = vmatprep.subr.mxu0 0.0
    %904 = vmatpush1.msra.mxu0 0.0
    %905 = vmatprep.subr.mxu0 0.0
    %906 = vmatpush1.msra.mxu0 0.0
    %907 = vmatprep.subr.mxu0 %v804
    %908 = vmatpush1.msra.mxu0 %v802
    %909 = vmatprep.subr.mxu0 0.0
    %910 = vmatpush2.msra.mxu0 0.0
    %911 = vmatprep.subr.mxu0 0.0
    %912 = vmatpush2.msra.mxu0 0.0
    %913 = vmatprep.subr.mxu0 0.0
    %914 = vmatpush2.msra.mxu0 0.0
    %915 = vmatprep.subr.mxu0 0.0
    %916 = vmatpush2.msra.mxu0 0.0
    %917 = vmatprep.subr.mxu0 0.0
    %918 = vmatpush2.msra.mxu0 0.0
    %919 = vmatprep.subr.mxu0 0.0
    %920 = vmatpush2.msra.mxu0 0.0
    %921 = vmatprep.subr.mxu0 0.0
    %922 = vmatpush2.msra.mxu0 0.0
    %923 = vmatprep.subr.mxu0 0.0
    %924 = vmatpush2.msra.mxu0 0.0
    %925 = vmatprep.subr.mxu0 0.0
    %926 = vmatpush2.msra.mxu0 0.0
    %927 = vmatprep.subr.mxu0 0.0
    %928 = vmatpush2.msra.mxu0 0.0
    %929 = vmatprep.subr.mxu0 0.0
    %930 = vmatpush2.msra.mxu0 0.0
    %931 = vmatprep.subr.mxu0 0.0
    %932 = vmatpush2.msra.mxu0 0.0
    %933 = vmatprep.subr.mxu0 0.0
    %934 = vmatpush2.msra.mxu0 0.0
    %935 = vmatprep.subr.mxu0 0.0
    %936 = vmatpush2.msra.mxu0 0.0
    %937 = vmatprep.subr.mxu0 0.0
    %938 = vmatpush2.msra.mxu0 0.0
    %939 = vmatprep.subr.mxu0 0.0
    %940 = vmatpush2.msra.mxu0 0.0
    %941 = vmatprep.mubr.f32.mxu0 0.0
    %942 = vmatmul.mubr.f32.gmra.mxu0 %v796
    %v943 = vpop.f32.mrf.mxu0
    %v944 = vadd.f32 0.0, %v943
    %v945 = vpop.f32.mrf.mxu0
    %v946 = vadd.f32 0.0, %v945
    %947 = vdwg.mxu0
    %v948 = vadd.f32 %v789, %v873
    %v949 = vadd.f32 %v790, %v875
    %v950 = vadd.f32 %v791, %v944
    %v951 = vadd.f32 %v792, %v946
    %952 = vrot.lane.b32.xlu0 %v15, 127
    %v953 = vpop.permute.xlu0 %952
    %954 = vrot.lane.b32.xlu0 %v19, 127
    %v955 = vpop.permute.xlu0 %954
    %956 = vrot.lane.b32.xlu0 %v17, 127
    %v957 = vpop.permute.xlu0 %956
    %958 = vrot.lane.b32.xlu0 %v21, 127
    %v959 = vpop.permute.xlu0 %958
    %960 = vrot.lane.b32.xlu0 0.0, 127
    %v961 = vpop.permute.xlu0 %960
    %vm962 = vcmask 1039360
    %v963 = vsel %vm962, %v953, %v955
    %v964 = vsel %vm962, %v955, %v957
    %v965 = vsel %vm962, %v957, %v959
    %v966 = vsel %vm962, %v959, %v961
    %v971 = vsel %vm413, %v963, 0.0
    %v972 = vsel %vm414, %v964, 0.0
    %v973 = vsel %vm415, %v965, 0.0
    %v974 = vsel %vm416, %v966, 0.0
    %s975 = scalar_lea.vmem %s1, 40
    %v976 = vld [vmem:[%s975] sm:$0xff]
    %v978 = vsel %vm97, %v976, 0
    %v981 = vsel %vm101, %v971, 0
    %v984 = vsel %vm101, %v972, 0
    %v987 = vsel %vm101, %v973, 0
    %v990 = vsel %vm101, %v974, 0
    %992 = vmatprep.subr.mxu0 0.0
    %993 = vmatpush1.msra.mxu0 0.0
    %994 = vmatprep.subr.mxu0 0.0
    %995 = vmatpush1.msra.mxu0 0.0
    %996 = vmatprep.subr.mxu0 0.0
    %997 = vmatpush1.msra.mxu0 0.0
    %998 = vmatprep.subr.mxu0 0.0
    %999 = vmatpush1.msra.mxu0 0.0
    %1000 = vmatprep.subr.mxu0 0.0
    %1001 = vmatpush1.msra.mxu0 0.0
    %1002 = vmatprep.subr.mxu0 0.0
    %1003 = vmatpush1.msra.mxu0 0.0
    %1004 = vmatprep.subr.mxu0 0.0
    %1005 = vmatpush1.msra.mxu0 0.0
    %1006 = vmatprep.subr.mxu0 0.0
    %1007 = vmatpush1.msra.mxu0 0.0
    %1008 = vmatprep.subr.mxu0 0.0
    %1009 = vmatpush1.msra.mxu0 0.0
    %1010 = vmatprep.subr.mxu0 0.0
    %1011 = vmatpush1.msra.mxu0 0.0
    %1012 = vmatprep.subr.mxu0 0.0
    %1013 = vmatpush1.msra.mxu0 0.0
    %1014 = vmatprep.subr.mxu0 0.0
    %1015 = vmatpush1.msra.mxu0 0.0
    %1016 = vmatprep.subr.mxu0 0.0
    %1017 = vmatpush1.msra.mxu0 0.0
    %1018 = vmatprep.subr.mxu0 0.0
    %1019 = vmatpush1.msra.mxu0 0.0
    %1020 = vmatprep.subr.mxu0 0.0
    %1021 = vmatpush1.msra.mxu0 0.0
    %1022 = vmatprep.subr.mxu0 %v984
    %1023 = vmatpush1.msra.mxu0 %v981
    %1024 = vmatprep.subr.mxu0 0.0
    %1025 = vmatpush2.msra.mxu0 0.0
    %1026 = vmatprep.subr.mxu0 0.0
    %1027 = vmatpush2.msra.mxu0 0.0
    %1028 = vmatprep.subr.mxu0 0.0
    %1029 = vmatpush2.msra.mxu0 0.0
    %1030 = vmatprep.subr.mxu0 0.0
    %1031 = vmatpush2.msra.mxu0 0.0
    %1032 = vmatprep.subr.mxu0 0.0
    %1033 = vmatpush2.msra.mxu0 0.0
    %1034 = vmatprep.subr.mxu0 0.0
    %1035 = vmatpush2.msra.mxu0 0.0
    %1036 = vmatprep.subr.mxu0 0.0
    %1037 = vmatpush2.msra.mxu0 0.0
    %1038 = vmatprep.subr.mxu0 0.0
    %1039 = vmatpush2.msra.mxu0 0.0
    %1040 = vmatprep.subr.mxu0 0.0
    %1041 = vmatpush2.msra.mxu0 0.0
    %1042 = vmatprep.subr.mxu0 0.0
    %1043 = vmatpush2.msra.mxu0 0.0
    %1044 = vmatprep.subr.mxu0 0.0
    %1045 = vmatpush2.msra.mxu0 0.0
    %1046 = vmatprep.subr.mxu0 0.0
    %1047 = vmatpush2.msra.mxu0 0.0
    %1048 = vmatprep.subr.mxu0 0.0
    %1049 = vmatpush2.msra.mxu0 0.0
    %1050 = vmatprep.subr.mxu0 0.0
    %1051 = vmatpush2.msra.mxu0 0.0
    %1052 = vmatprep.subr.mxu0 0.0
    %1053 = vmatpush2.msra.mxu0 0.0
    %1054 = vmatprep.subr.mxu0 0.0
    %1055 = vmatpush2.msra.mxu0 0.0
    %1056 = vmatprep.mubr.f32.mxu0 0.0
    %1057 = vmatmul.mubr.f32.gmra.mxu0 %v978
    %v1058 = vpop.f32.mrf.mxu0
    %v1059 = vadd.f32 0.0, %v1058
    %v1060 = vpop.f32.mrf.mxu0
    %v1061 = vadd.f32 0.0, %v1060
    %1062 = vdwg.mxu0
    %1063 = vmatprep.subr.mxu0 0.0
    %1064 = vmatpush1.msra.mxu0 0.0
    %1065 = vmatprep.subr.mxu0 0.0
    %1066 = vmatpush1.msra.mxu0 0.0
    %1067 = vmatprep.subr.mxu0 0.0
    %1068 = vmatpush1.msra.mxu0 0.0
    %1069 = vmatprep.subr.mxu0 0.0
    %1070 = vmatpush1.msra.mxu0 0.0
    %1071 = vmatprep.subr.mxu0 0.0
    %1072 = vmatpush1.msra.mxu0 0.0
    %1073 = vmatprep.subr.mxu0 0.0
    %1074 = vmatpush1.msra.mxu0 0.0
    %1075 = vmatprep.subr.mxu0 0.0
    %1076 = vmatpush1.msra.mxu0 0.0
    %1077 = vmatprep.subr.mxu0 0.0
    %1078 = vmatpush1.msra.mxu0 0.0
    %1079 = vmatprep.subr.mxu0 0.0
    %1080 = vmatpush1.msra.mxu0 0.0
    %1081 = vmatprep.subr.mxu0 0.0
    %1082 = vmatpush1.msra.mxu0 0.0
    %1083 = vmatprep.subr.mxu0 0.0
    %1084 = vmatpush1.msra.mxu0 0.0
    %1085 = vmatprep.subr.mxu0 0.0
    %1086 = vmatpush1.msra.mxu0 0.0
    %1087 = vmatprep.subr.mxu0 0.0
    %1088 = vmatpush1.msra.mxu0 0.0
    %1089 = vmatprep.subr.mxu0 0.0
    %1090 = vmatpush1.msra.mxu0 0.0
    %1091 = vmatprep.subr.mxu0 0.0
    %1092 = vmatpush1.msra.mxu0 0.0
    %1093 = vmatprep.subr.mxu0 %v990
    %1094 = vmatpush1.msra.mxu0 %v987
    %1095 = vmatprep.subr.mxu0 0.0
    %1096 = vmatpush2.msra.mxu0 0.0
    %1097 = vmatprep.subr.mxu0 0.0
    %1098 = vmatpush2.msra.mxu0 0.0
    %1099 = vmatprep.subr.mxu0 0.0
    %1100 = vmatpush2.msra.mxu0 0.0
    %1101 = vmatprep.subr.mxu0 0.0
    %1102 = vmatpush2.msra.mxu0 0.0
    %1103 = vmatprep.subr.mxu0 0.0
    %1104 = vmatpush2.msra.mxu0 0.0
    %1105 = vmatprep.subr.mxu0 0.0
    %1106 = vmatpush2.msra.mxu0 0.0
    %1107 = vmatprep.subr.mxu0 0.0
    %1108 = vmatpush2.msra.mxu0 0.0
    %1109 = vmatprep.subr.mxu0 0.0
    %1110 = vmatpush2.msra.mxu0 0.0
    %1111 = vmatprep.subr.mxu0 0.0
    %1112 = vmatpush2.msra.mxu0 0.0
    %1113 = vmatprep.subr.mxu0 0.0
    %1114 = vmatpush2.msra.mxu0 0.0
    %1115 = vmatprep.subr.mxu0 0.0
    %1116 = vmatpush2.msra.mxu0 0.0
    %1117 = vmatprep.subr.mxu0 0.0
    %1118 = vmatpush2.msra.mxu0 0.0
    %1119 = vmatprep.subr.mxu0 0.0
    %1120 = vmatpush2.msra.mxu0 0.0
    %1121 = vmatprep.subr.mxu0 0.0
    %1122 = vmatpush2.msra.mxu0 0.0
    %1123 = vmatprep.subr.mxu0 0.0
    %1124 = vmatpush2.msra.mxu0 0.0
    %1125 = vmatprep.subr.mxu0 0.0
    %1126 = vmatpush2.msra.mxu0 0.0
    %1127 = vmatprep.mubr.f32.mxu0 0.0
    %1128 = vmatmul.mubr.f32.gmra.mxu0 %v978
    %v1129 = vpop.f32.mrf.mxu0
    %v1130 = vadd.f32 0.0, %v1129
    %v1131 = vpop.f32.mrf.mxu0
    %v1132 = vadd.f32 0.0, %v1131
    %1133 = vdwg.mxu0
    %v1134 = vadd.f32 %v948, %v1059
    %v1135 = vadd.f32 %v949, %v1061
    %v1136 = vadd.f32 %v950, %v1130
    %v1137 = vadd.f32 %v951, %v1132
    %vm1138 = vcmp.lt.s32.totalorder %v27, 240
    %vm1139 = vcmp.lt.s32.totalorder %v28, 240
    %vm1140 = vcmp.lt.s32.totalorder %v29, 240
    %vm1141 = vcmp.lt.s32.totalorder %v30, 240
    %vm1142 = vmand %vm1138, %vm39
    %vm1143 = vmand %vm1139, %vm40
    %vm1144 = vmand %vm1140, %vm41
    %vm1145 = vmand %vm1141, %vm42
    %1146 = vrot.lane.b32.xlu0 %v15, 113
    %v1147 = vpop.permute.xlu0 %1146
    %1148 = vrot.lane.b32.xlu0 %v19, 113
    %v1149 = vpop.permute.xlu0 %1148
    %1150 = vrot.lane.b32.xlu0 %v17, 113
    %v1151 = vpop.permute.xlu0 %1150
    %1152 = vrot.lane.b32.xlu0 %v21, 113
    %v1153 = vpop.permute.xlu0 %1152
    %1154 = vrot.lane.b32.xlu0 0.0, 113
    %v1155 = vpop.permute.xlu0 %1154
    %vm1156 = vcmask 924672
    %v1157 = vsel %vm1156, %v1147, %v1149
    %v1158 = vsel %vm1156, %v1149, %v1151
    %v1159 = vsel %vm1156, %v1151, %v1153
    %v1160 = vsel %vm1156, %v1153, %v1155
    %v1165 = vsel %vm1142, %v1157, 0.0
    %v1166 = vsel %vm1143, %v1158, 0.0
    %v1167 = vsel %vm1144, %v1159, 0.0
    %v1168 = vsel %vm1145, %v1160, 0.0
    %s1169 = scalar_lea.vmem %s1, 48
    %v1170 = vld [vmem:[%s1169] sm:$0xff]
    %v1172 = vsel %vm97, %v1170, 0
    %v1175 = vsel %vm101, %v1165, 0
    %v1178 = vsel %vm101, %v1166, 0
    %v1181 = vsel %vm101, %v1167, 0
    %v1184 = vsel %vm101, %v1168, 0
    %1186 = vmatprep.subr.mxu0 0.0
    %1187 = vmatpush1.msra.mxu0 0.0
    %1188 = vmatprep.subr.mxu0 0.0
    %1189 = vmatpush1.msra.mxu0 0.0
    %1190 = vmatprep.subr.mxu0 0.0
    %1191 = vmatpush1.msra.mxu0 0.0
    %1192 = vmatprep.subr.mxu0 0.0
    %1193 = vmatpush1.msra.mxu0 0.0
    %1194 = vmatprep.subr.mxu0 0.0
    %1195 = vmatpush1.msra.mxu0 0.0
    %1196 = vmatprep.subr.mxu0 0.0
    %1197 = vmatpush1.msra.mxu0 0.0
    %1198 = vmatprep.subr.mxu0 0.0
    %1199 = vmatpush1.msra.mxu0 0.0
    %1200 = vmatprep.subr.mxu0 0.0
    %1201 = vmatpush1.msra.mxu0 0.0
    %1202 = vmatprep.subr.mxu0 0.0
    %1203 = vmatpush1.msra.mxu0 0.0
    %1204 = vmatprep.subr.mxu0 0.0
    %1205 = vmatpush1.msra.mxu0 0.0
    %1206 = vmatprep.subr.mxu0 0.0
    %1207 = vmatpush1.msra.mxu0 0.0
    %1208 = vmatprep.subr.mxu0 0.0
    %1209 = vmatpush1.msra.mxu0 0.0
    %1210 = vmatprep.subr.mxu0 0.0
    %1211 = vmatpush1.msra.mxu0 0.0
    %1212 = vmatprep.subr.mxu0 0.0
    %1213 = vmatpush1.msra.mxu0 0.0
    %1214 = vmatprep.subr.mxu0 0.0
    %1215 = vmatpush1.msra.mxu0 0.0
    %1216 = vmatprep.subr.mxu0 %v1178
    %1217 = vmatpush1.msra.mxu0 %v1175
    %1218 = vmatprep.subr.mxu0 0.0
    %1219 = vmatpush2.msra.mxu0 0.0
    %1220 = vmatprep.subr.mxu0 0.0
    %1221 = vmatpush2.msra.mxu0 0.0
    %1222 = vmatprep.subr.mxu0 0.0
    %1223 = vmatpush2.msra.mxu0 0.0
    %1224 = vmatprep.subr.mxu0 0.0
    %1225 = vmatpush2.msra.mxu0 0.0
    %1226 = vmatprep.subr.mxu0 0.0
    %1227 = vmatpush2.msra.mxu0 0.0
    %1228 = vmatprep.subr.mxu0 0.0
    %1229 = vmatpush2.msra.mxu0 0.0
    %1230 = vmatprep.subr.mxu0 0.0
    %1231 = vmatpush2.msra.mxu0 0.0
    %1232 = vmatprep.subr.mxu0 0.0
    %1233 = vmatpush2.msra.mxu0 0.0
    %1234 = vmatprep.subr.mxu0 0.0
    %1235 = vmatpush2.msra.mxu0 0.0
    %1236 = vmatprep.subr.mxu0 0.0
    %1237 = vmatpush2.msra.mxu0 0.0
    %1238 = vmatprep.subr.mxu0 0.0
    %1239 = vmatpush2.msra.mxu0 0.0
    %1240 = vmatprep.subr.mxu0 0.0
    %1241 = vmatpush2.msra.mxu0 0.0
    %1242 = vmatprep.subr.mxu0 0.0
    %1243 = vmatpush2.msra.mxu0 0.0
    %1244 = vmatprep.subr.mxu0 0.0
    %1245 = vmatpush2.msra.mxu0 0.0
    %1246 = vmatprep.subr.mxu0 0.0
    %1247 = vmatpush2.msra.mxu0 0.0
    %1248 = vmatprep.subr.mxu0 0.0
    %1249 = vmatpush2.msra.mxu0 0.0
    %1250 = vmatprep.mubr.f32.mxu0 0.0
    %1251 = vmatmul.mubr.f32.gmra.mxu0 %v1172
    %v1252 = vpop.f32.mrf.mxu0
    %v1253 = vadd.f32 0.0, %v1252
    %v1254 = vpop.f32.mrf.mxu0
    %v1255 = vadd.f32 0.0, %v1254
    %1256 = vdwg.mxu0
    %1257 = vmatprep.subr.mxu0 0.0
    %1258 = vmatpush1.msra.mxu0 0.0
    %1259 = vmatprep.subr.mxu0 0.0
    %1260 = vmatpush1.msra.mxu0 0.0
    %1261 = vmatprep.subr.mxu0 0.0
    %1262 = vmatpush1.msra.mxu0 0.0
    %1263 = vmatprep.subr.mxu0 0.0
    %1264 = vmatpush1.msra.mxu0 0.0
    %1265 = vmatprep.subr.mxu0 0.0
    %1266 = vmatpush1.msra.mxu0 0.0
    %1267 = vmatprep.subr.mxu0 0.0
    %1268 = vmatpush1.msra.mxu0 0.0
    %1269 = vmatprep.subr.mxu0 0.0
    %1270 = vmatpush1.msra.mxu0 0.0
    %1271 = vmatprep.subr.mxu0 0.0
    %1272 = vmatpush1.msra.mxu0 0.0
    %1273 = vmatprep.subr.mxu0 0.0
    %1274 = vmatpush1.msra.mxu0 0.0
    %1275 = vmatprep.subr.mxu0 0.0
    %1276 = vmatpush1.msra.mxu0 0.0
    %1277 = vmatprep.subr.mxu0 0.0
    %1278 = vmatpush1.msra.mxu0 0.0
    %1279 = vmatprep.subr.mxu0 0.0
    %1280 = vmatpush1.msra.mxu0 0.0
    %1281 = vmatprep.subr.mxu0 0.0
    %1282 = vmatpush1.msra.mxu0 0.0
    %1283 = vmatprep.subr.mxu0 0.0
    %1284 = vmatpush1.msra.mxu0 0.0
    %1285 = vmatprep.subr.mxu0 0.0
    %1286 = vmatpush1.msra.mxu0 0.0
    %1287 = vmatprep.subr.mxu0 %v1184
    %1288 = vmatpush1.msra.mxu0 %v1181
    %1289 = vmatprep.subr.mxu0 0.0
    %1290 = vmatpush2.msra.mxu0 0.0
    %1291 = vmatprep.subr.mxu0 0.0
    %1292 = vmatpush2.msra.mxu0 0.0
    %1293 = vmatprep.subr.mxu0 0.0
    %1294 = vmatpush2.msra.mxu0 0.0
    %1295 = vmatprep.subr.mxu0 0.0
    %1296 = vmatpush2.msra.mxu0 0.0
    %1297 = vmatprep.subr.mxu0 0.0
    %1298 = vmatpush2.msra.mxu0 0.0
    %1299 = vmatprep.subr.mxu0 0.0
    %1300 = vmatpush2.msra.mxu0 0.0
    %1301 = vmatprep.subr.mxu0 0.0
    %1302 = vmatpush2.msra.mxu0 0.0
    %1303 = vmatprep.subr.mxu0 0.0
    %1304 = vmatpush2.msra.mxu0 0.0
    %1305 = vmatprep.subr.mxu0 0.0
    %1306 = vmatpush2.msra.mxu0 0.0
    %1307 = vmatprep.subr.mxu0 0.0
    %1308 = vmatpush2.msra.mxu0 0.0
    %1309 = vmatprep.subr.mxu0 0.0
    %1310 = vmatpush2.msra.mxu0 0.0
    %1311 = vmatprep.subr.mxu0 0.0
    %1312 = vmatpush2.msra.mxu0 0.0
    %1313 = vmatprep.subr.mxu0 0.0
    %1314 = vmatpush2.msra.mxu0 0.0
    %1315 = vmatprep.subr.mxu0 0.0
    %1316 = vmatpush2.msra.mxu0 0.0
    %1317 = vmatprep.subr.mxu0 0.0
    %1318 = vmatpush2.msra.mxu0 0.0
    %1319 = vmatprep.subr.mxu0 0.0
    %1320 = vmatpush2.msra.mxu0 0.0
    %1321 = vmatprep.mubr.f32.mxu0 0.0
    %1322 = vmatmul.mubr.f32.gmra.mxu0 %v1172
    %v1323 = vpop.f32.mrf.mxu0
    %v1324 = vadd.f32 0.0, %v1323
    %v1325 = vpop.f32.mrf.mxu0
    %v1326 = vadd.f32 0.0, %v1325
    %1327 = vdwg.mxu0
    %v1328 = vadd.f32 %v1134, %v1253
    %v1329 = vadd.f32 %v1135, %v1255
    %v1330 = vadd.f32 %v1136, %v1324
    %v1331 = vadd.f32 %v1137, %v1326
    %1332 = vrot.lane.b32.xlu0 %v15, 112
    %v1333 = vpop.permute.xlu0 %1332
    %1334 = vrot.lane.b32.xlu0 %v19, 112
    %v1335 = vpop.permute.xlu0 %1334
    %1336 = vrot.lane.b32.xlu0 %v17, 112
    %v1337 = vpop.permute.xlu0 %1336
    %1338 = vrot.lane.b32.xlu0 %v21, 112
    %v1339 = vpop.permute.xlu0 %1338
    %1340 = vrot.lane.b32.xlu0 0.0, 112
    %v1341 = vpop.permute.xlu0 %1340
    %vm1342 = vcmask 916480
    %v1343 = vsel %vm1342, %v1333, %v1335
    %v1344 = vsel %vm1342, %v1335, %v1337
    %v1345 = vsel %vm1342, %v1337, %v1339
    %v1346 = vsel %vm1342, %v1339, %v1341
    %v1351 = vsel %vm1138, %v1343, 0.0
    %v1352 = vsel %vm1139, %v1344, 0.0
    %v1353 = vsel %vm1140, %v1345, 0.0
    %v1354 = vsel %vm1141, %v1346, 0.0
    %s1355 = scalar_lea.vmem %s1, 56
    %v1356 = vld [vmem:[%s1355] sm:$0xff]
    %v1358 = vsel %vm97, %v1356, 0
    %v1361 = vsel %vm101, %v1351, 0
    %v1364 = vsel %vm101, %v1352, 0
    %v1367 = vsel %vm101, %v1353, 0
    %v1370 = vsel %vm101, %v1354, 0
    %1372 = vmatprep.subr.mxu0 0.0
    %1373 = vmatpush1.msra.mxu0 0.0
    %1374 = vmatprep.subr.mxu0 0.0
    %1375 = vmatpush1.msra.mxu0 0.0
    %1376 = vmatprep.subr.mxu0 0.0
    %1377 = vmatpush1.msra.mxu0 0.0
    %1378 = vmatprep.subr.mxu0 0.0
    %1379 = vmatpush1.msra.mxu0 0.0
    %1380 = vmatprep.subr.mxu0 0.0
    %1381 = vmatpush1.msra.mxu0 0.0
    %1382 = vmatprep.subr.mxu0 0.0
    %1383 = vmatpush1.msra.mxu0 0.0
    %1384 = vmatprep.subr.mxu0 0.0
    %1385 = vmatpush1.msra.mxu0 0.0
    %1386 = vmatprep.subr.mxu0 0.0
    %1387 = vmatpush1.msra.mxu0 0.0
    %1388 = vmatprep.subr.mxu0 0.0
    %1389 = vmatpush1.msra.mxu0 0.0
    %1390 = vmatprep.subr.mxu0 0.0
    %1391 = vmatpush1.msra.mxu0 0.0
    %1392 = vmatprep.subr.mxu0 0.0
    %1393 = vmatpush1.msra.mxu0 0.0
    %1394 = vmatprep.subr.mxu0 0.0
    %1395 = vmatpush1.msra.mxu0 0.0
    %1396 = vmatprep.subr.mxu0 0.0
    %1397 = vmatpush1.msra.mxu0 0.0
    %1398 = vmatprep.subr.mxu0 0.0
    %1399 = vmatpush1.msra.mxu0 0.0
    %1400 = vmatprep.subr.mxu0 0.0
    %1401 = vmatpush1.msra.mxu0 0.0
    %1402 = vmatprep.subr.mxu0 %v1364
    %1403 = vmatpush1.msra.mxu0 %v1361
    %1404 = vmatprep.subr.mxu0 0.0
    %1405 = vmatpush2.msra.mxu0 0.0
    %1406 = vmatprep.subr.mxu0 0.0
    %1407 = vmatpush2.msra.mxu0 0.0
    %1408 = vmatprep.subr.mxu0 0.0
    %1409 = vmatpush2.msra.mxu0 0.0
    %1410 = vmatprep.subr.mxu0 0.0
    %1411 = vmatpush2.msra.mxu0 0.0
    %1412 = vmatprep.subr.mxu0 0.0
    %1413 = vmatpush2.msra.mxu0 0.0
    %1414 = vmatprep.subr.mxu0 0.0
    %1415 = vmatpush2.msra.mxu0 0.0
    %1416 = vmatprep.subr.mxu0 0.0
    %1417 = vmatpush2.msra.mxu0 0.0
    %1418 = vmatprep.subr.mxu0 0.0
    %1419 = vmatpush2.msra.mxu0 0.0
    %1420 = vmatprep.subr.mxu0 0.0
    %1421 = vmatpush2.msra.mxu0 0.0
    %1422 = vmatprep.subr.mxu0 0.0
    %1423 = vmatpush2.msra.mxu0 0.0
    %1424 = vmatprep.subr.mxu0 0.0
    %1425 = vmatpush2.msra.mxu0 0.0
    %1426 = vmatprep.subr.mxu0 0.0
    %1427 = vmatpush2.msra.mxu0 0.0
    %1428 = vmatprep.subr.mxu0 0.0
    %1429 = vmatpush2.msra.mxu0 0.0
    %1430 = vmatprep.subr.mxu0 0.0
    %1431 = vmatpush2.msra.mxu0 0.0
    %1432 = vmatprep.subr.mxu0 0.0
    %1433 = vmatpush2.msra.mxu0 0.0
    %1434 = vmatprep.subr.mxu0 0.0
    %1435 = vmatpush2.msra.mxu0 0.0
    %1436 = vmatprep.mubr.f32.mxu0 0.0
    %1437 = vmatmul.mubr.f32.gmra.mxu0 %v1358
    %v1438 = vpop.f32.mrf.mxu0
    %v1439 = vadd.f32 0.0, %v1438
    %v1440 = vpop.f32.mrf.mxu0
    %v1441 = vadd.f32 0.0, %v1440
    %1442 = vdwg.mxu0
    %1443 = vmatprep.subr.mxu0 0.0
    %1444 = vmatpush1.msra.mxu0 0.0
    %1445 = vmatprep.subr.mxu0 0.0
    %1446 = vmatpush1.msra.mxu0 0.0
    %1447 = vmatprep.subr.mxu0 0.0
    %1448 = vmatpush1.msra.mxu0 0.0
    %1449 = vmatprep.subr.mxu0 0.0
    %1450 = vmatpush1.msra.mxu0 0.0
    %1451 = vmatprep.subr.mxu0 0.0
    %1452 = vmatpush1.msra.mxu0 0.0
    %1453 = vmatprep.subr.mxu0 0.0
    %1454 = vmatpush1.msra.mxu0 0.0
    %1455 = vmatprep.subr.mxu0 0.0
    %1456 = vmatpush1.msra.mxu0 0.0
    %1457 = vmatprep.subr.mxu0 0.0
    %1458 = vmatpush1.msra.mxu0 0.0
    %1459 = vmatprep.subr.mxu0 0.0
    %1460 = vmatpush1.msra.mxu0 0.0
    %1461 = vmatprep.subr.mxu0 0.0
    %1462 = vmatpush1.msra.mxu0 0.0
    %1463 = vmatprep.subr.mxu0 0.0
    %1464 = vmatpush1.msra.mxu0 0.0
    %1465 = vmatprep.subr.mxu0 0.0
    %1466 = vmatpush1.msra.mxu0 0.0
    %1467 = vmatprep.subr.mxu0 0.0
    %1468 = vmatpush1.msra.mxu0 0.0
    %1469 = vmatprep.subr.mxu0 0.0
    %1470 = vmatpush1.msra.mxu0 0.0
    %1471 = vmatprep.subr.mxu0 0.0
    %1472 = vmatpush1.msra.mxu0 0.0
    %1473 = vmatprep.subr.mxu0 %v1370
    %1474 = vmatpush1.msra.mxu0 %v1367
    %1475 = vmatprep.subr.mxu0 0.0
    %1476 = vmatpush2.msra.mxu0 0.0
    %1477 = vmatprep.subr.mxu0 0.0
    %1478 = vmatpush2.msra.mxu0 0.0
    %1479 = vmatprep.subr.mxu0 0.0
    %1480 = vmatpush2.msra.mxu0 0.0
    %1481 = vmatprep.subr.mxu0 0.0
    %1482 = vmatpush2.msra.mxu0 0.0
    %1483 = vmatprep.subr.mxu0 0.0
    %1484 = vmatpush2.msra.mxu0 0.0
    %1485 = vmatprep.subr.mxu0 0.0
    %1486 = vmatpush2.msra.mxu0 0.0
    %1487 = vmatprep.subr.mxu0 0.0
    %1488 = vmatpush2.msra.mxu0 0.0
    %1489 = vmatprep.subr.mxu0 0.0
    %1490 = vmatpush2.msra.mxu0 0.0
    %1491 = vmatprep.subr.mxu0 0.0
    %1492 = vmatpush2.msra.mxu0 0.0
    %1493 = vmatprep.subr.mxu0 0.0
    %1494 = vmatpush2.msra.mxu0 0.0
    %1495 = vmatprep.subr.mxu0 0.0
    %1496 = vmatpush2.msra.mxu0 0.0
    %1497 = vmatprep.subr.mxu0 0.0
    %1498 = vmatpush2.msra.mxu0 0.0
    %1499 = vmatprep.subr.mxu0 0.0
    %1500 = vmatpush2.msra.mxu0 0.0
    %1501 = vmatprep.subr.mxu0 0.0
    %1502 = vmatpush2.msra.mxu0 0.0
    %1503 = vmatprep.subr.mxu0 0.0
    %1504 = vmatpush2.msra.mxu0 0.0
    %1505 = vmatprep.subr.mxu0 0.0
    %1506 = vmatpush2.msra.mxu0 0.0
    %1507 = vmatprep.mubr.f32.mxu0 0.0
    %1508 = vmatmul.mubr.f32.gmra.mxu0 %v1358
    %v1509 = vpop.f32.mrf.mxu0
    %v1510 = vadd.f32 0.0, %v1509
    %v1511 = vpop.f32.mrf.mxu0
    %v1512 = vadd.f32 0.0, %v1511
    %1513 = vdwg.mxu0
    %v1514 = vadd.f32 %v1328, %v1439
    %v1515 = vadd.f32 %v1329, %v1441
    %v1516 = vadd.f32 %v1330, %v1510
    %v1517 = vadd.f32 %v1331, %v1512
    %vm1518 = vmand %vm1138, %vm413
    %vm1519 = vmand %vm1139, %vm414
    %vm1520 = vmand %vm1140, %vm415
    %vm1521 = vmand %vm1141, %vm416
    %1522 = vrot.lane.b32.xlu0 %v15, 111
    %v1523 = vpop.permute.xlu0 %1522
    %1524 = vrot.lane.b32.xlu0 %v19, 111
    %v1525 = vpop.permute.xlu0 %1524
    %1526 = vrot.lane.b32.xlu0 %v17, 111
    %v1527 = vpop.permute.xlu0 %1526
    %1528 = vrot.lane.b32.xlu0 %v21, 111
    %v1529 = vpop.permute.xlu0 %1528
    %1530 = vrot.lane.b32.xlu0 0.0, 111
    %v1531 = vpop.permute.xlu0 %1530
    %vm1532 = vcmask 908288
    %v1533 = vsel %vm1532, %v1523, %v1525
    %v1534 = vsel %vm1532, %v1525, %v1527
    %v1535 = vsel %vm1532, %v1527, %v1529
    %v1536 = vsel %vm1532, %v1529, %v1531
    %v1541 = vsel %vm1518, %v1533, 0.0
    %v1542 = vsel %vm1519, %v1534, 0.0
    %v1543 = vsel %vm1520, %v1535, 0.0
    %v1544 = vsel %vm1521, %v1536, 0.0
    %s1545 = scalar_lea.vmem %s1, 64
    %v1546 = vld [vmem:[%s1545] sm:$0xff]
    %v1548 = vsel %vm97, %v1546, 0
    %v1551 = vsel %vm101, %v1541, 0
    %v1554 = vsel %vm101, %v1542, 0
    %v1557 = vsel %vm101, %v1543, 0
    %v1560 = vsel %vm101, %v1544, 0
    %1562 = vmatprep.subr.mxu0 0.0
    %1563 = vmatpush1.msra.mxu0 0.0
    %1564 = vmatprep.subr.mxu0 0.0
    %1565 = vmatpush1.msra.mxu0 0.0
    %1566 = vmatprep.subr.mxu0 0.0
    %1567 = vmatpush1.msra.mxu0 0.0
    %1568 = vmatprep.subr.mxu0 0.0
    %1569 = vmatpush1.msra.mxu0 0.0
    %1570 = vmatprep.subr.mxu0 0.0
    %1571 = vmatpush1.msra.mxu0 0.0
    %1572 = vmatprep.subr.mxu0 0.0
    %1573 = vmatpush1.msra.mxu0 0.0
    %1574 = vmatprep.subr.mxu0 0.0
    %1575 = vmatpush1.msra.mxu0 0.0
    %1576 = vmatprep.subr.mxu0 0.0
    %1577 = vmatpush1.msra.mxu0 0.0
    %1578 = vmatprep.subr.mxu0 0.0
    %1579 = vmatpush1.msra.mxu0 0.0
    %1580 = vmatprep.subr.mxu0 0.0
    %1581 = vmatpush1.msra.mxu0 0.0
    %1582 = vmatprep.subr.mxu0 0.0
    %1583 = vmatpush1.msra.mxu0 0.0
    %1584 = vmatprep.subr.mxu0 0.0
    %1585 = vmatpush1.msra.mxu0 0.0
    %1586 = vmatprep.subr.mxu0 0.0
    %1587 = vmatpush1.msra.mxu0 0.0
    %1588 = vmatprep.subr.mxu0 0.0
    %1589 = vmatpush1.msra.mxu0 0.0
    %1590 = vmatprep.subr.mxu0 0.0
    %1591 = vmatpush1.msra.mxu0 0.0
    %1592 = vmatprep.subr.mxu0 %v1554
    %1593 = vmatpush1.msra.mxu0 %v1551
    %1594 = vmatprep.subr.mxu0 0.0
    %1595 = vmatpush2.msra.mxu0 0.0
    %1596 = vmatprep.subr.mxu0 0.0
    %1597 = vmatpush2.msra.mxu0 0.0
    %1598 = vmatprep.subr.mxu0 0.0
    %1599 = vmatpush2.msra.mxu0 0.0
    %1600 = vmatprep.subr.mxu0 0.0
    %1601 = vmatpush2.msra.mxu0 0.0
    %1602 = vmatprep.subr.mxu0 0.0
    %1603 = vmatpush2.msra.mxu0 0.0
    %1604 = vmatprep.subr.mxu0 0.0
    %1605 = vmatpush2.msra.mxu0 0.0
    %1606 = vmatprep.subr.mxu0 0.0
    %1607 = vmatpush2.msra.mxu0 0.0
    %1608 = vmatprep.subr.mxu0 0.0
    %1609 = vmatpush2.msra.mxu0 0.0
    %1610 = vmatprep.subr.mxu0 0.0
    %1611 = vmatpush2.msra.mxu0 0.0
    %1612 = vmatprep.subr.mxu0 0.0
    %1613 = vmatpush2.msra.mxu0 0.0
    %1614 = vmatprep.subr.mxu0 0.0
    %1615 = vmatpush2.msra.mxu0 0.0
    %1616 = vmatprep.subr.mxu0 0.0
    %1617 = vmatpush2.msra.mxu0 0.0
    %1618 = vmatprep.subr.mxu0 0.0
    %1619 = vmatpush2.msra.mxu0 0.0
    %1620 = vmatprep.subr.mxu0 0.0
    %1621 = vmatpush2.msra.mxu0 0.0
    %1622 = vmatprep.subr.mxu0 0.0
    %1623 = vmatpush2.msra.mxu0 0.0
    %1624 = vmatprep.subr.mxu0 0.0
    %1625 = vmatpush2.msra.mxu0 0.0
    %1626 = vmatprep.mubr.f32.mxu0 0.0
    %1627 = vmatmul.mubr.f32.gmra.mxu0 %v1548
    %v1628 = vpop.f32.mrf.mxu0
    %v1629 = vadd.f32 0.0, %v1628
    %v1630 = vpop.f32.mrf.mxu0
    %v1631 = vadd.f32 0.0, %v1630
    %1632 = vdwg.mxu0
    %1633 = vmatprep.subr.mxu0 0.0
    %1634 = vmatpush1.msra.mxu0 0.0
    %1635 = vmatprep.subr.mxu0 0.0
    %1636 = vmatpush1.msra.mxu0 0.0
    %1637 = vmatprep.subr.mxu0 0.0
    %1638 = vmatpush1.msra.mxu0 0.0
    %1639 = vmatprep.subr.mxu0 0.0
    %1640 = vmatpush1.msra.mxu0 0.0
    %1641 = vmatprep.subr.mxu0 0.0
    %1642 = vmatpush1.msra.mxu0 0.0
    %1643 = vmatprep.subr.mxu0 0.0
    %1644 = vmatpush1.msra.mxu0 0.0
    %1645 = vmatprep.subr.mxu0 0.0
    %1646 = vmatpush1.msra.mxu0 0.0
    %1647 = vmatprep.subr.mxu0 0.0
    %1648 = vmatpush1.msra.mxu0 0.0
    %1649 = vmatprep.subr.mxu0 0.0
    %1650 = vmatpush1.msra.mxu0 0.0
    %1651 = vmatprep.subr.mxu0 0.0
    %1652 = vmatpush1.msra.mxu0 0.0
    %1653 = vmatprep.subr.mxu0 0.0
    %1654 = vmatpush1.msra.mxu0 0.0
    %1655 = vmatprep.subr.mxu0 0.0
    %1656 = vmatpush1.msra.mxu0 0.0
    %1657 = vmatprep.subr.mxu0 0.0
    %1658 = vmatpush1.msra.mxu0 0.0
    %1659 = vmatprep.subr.mxu0 0.0
    %1660 = vmatpush1.msra.mxu0 0.0
    %1661 = vmatprep.subr.mxu0 0.0
    %1662 = vmatpush1.msra.mxu0 0.0
    %1663 = vmatprep.subr.mxu0 %v1560
    %1664 = vmatpush1.msra.mxu0 %v1557
    %1665 = vmatprep.subr.mxu0 0.0
    %1666 = vmatpush2.msra.mxu0 0.0
    %1667 = vmatprep.subr.mxu0 0.0
    %1668 = vmatpush2.msra.mxu0 0.0
    %1669 = vmatprep.subr.mxu0 0.0
    %1670 = vmatpush2.msra.mxu0 0.0
    %1671 = vmatprep.subr.mxu0 0.0
    %1672 = vmatpush2.msra.mxu0 0.0
    %1673 = vmatprep.subr.mxu0 0.0
    %1674 = vmatpush2.msra.mxu0 0.0
    %1675 = vmatprep.subr.mxu0 0.0
    %1676 = vmatpush2.msra.mxu0 0.0
    %1677 = vmatprep.subr.mxu0 0.0
    %1678 = vmatpush2.msra.mxu0 0.0
    %1679 = vmatprep.subr.mxu0 0.0
    %1680 = vmatpush2.msra.mxu0 0.0
    %1681 = vmatprep.subr.mxu0 0.0
    %1682 = vmatpush2.msra.mxu0 0.0
    %1683 = vmatprep.subr.mxu0 0.0
    %1684 = vmatpush2.msra.mxu0 0.0
    %1685 = vmatprep.subr.mxu0 0.0
    %1686 = vmatpush2.msra.mxu0 0.0
    %1687 = vmatprep.subr.mxu0 0.0
    %1688 = vmatpush2.msra.mxu0 0.0
    %1689 = vmatprep.subr.mxu0 0.0
    %1690 = vmatpush2.msra.mxu0 0.0
    %1691 = vmatprep.subr.mxu0 0.0
    %1692 = vmatpush2.msra.mxu0 0.0
    %1693 = vmatprep.subr.mxu0 0.0
    %1694 = vmatpush2.msra.mxu0 0.0
    %1695 = vmatprep.subr.mxu0 0.0
    %1696 = vmatpush2.msra.mxu0 0.0
    %1697 = vmatprep.mubr.f32.mxu0 0.0
    %1698 = vmatmul.mubr.f32.gmra.mxu0 %v1548
    %v1699 = vpop.f32.mrf.mxu0
    %v1700 = vadd.f32 0.0, %v1699
    %v1701 = vpop.f32.mrf.mxu0
    %v1702 = vadd.f32 0.0, %v1701
    %1703 = vdwg.mxu0
    %v1704 = vadd.f32 %v1514, %v1629
    %v1705 = vadd.f32 %v1515, %v1631
    %v1706 = vadd.f32 %v1516, %v1700
    %v1707 = vadd.f32 %v1517, %v1702
    %v1708 = vadd.f32 %v1704, %v1705
    %v1709 = vadd.f32 %v1708, %v1706
    %v1710 = vadd.f32 %v1709, %v1707
    %1711 = vadd.xlane.f32.xlu0 %v1710
    %v1712 = vpop.xlane.xlu0 %1711
    %v1713 = vmul.f32 %v1704, %v1704
    %v1714 = vmul.f32 %v1705, %v1705
    %v1715 = vmul.f32 %v1706, %v1706
    %v1716 = vmul.f32 %v1707, %v1707
    %v1717 = vadd.f32 %v1713, %v1714
    %v1718 = vadd.f32 %v1717, %v1715
    %v1719 = vadd.f32 %v1718, %v1716
    %1720 = vadd.xlane.f32.xlu0 %v1719
    %v1721 = vpop.xlane.xlu0 %1720
    %v1722 = vmul.f32 %v1712, 0.001953125
    %v1723 = vmul.f32 %v1721, 0.001953125
    %v1724 = vmul.f32 %v1722, %v1722
    %v1725 = vsub.f32 %v1723, %v1724
    %v1726 = vmax.f32 %v1725, 0.0
    %v1727 = vld [vmem:[%s2] sm:$0xff]
    %v1728 = vadd.f32 %v1726, 1e-05
    %v1729 = vrsqrt.pop %v1728
    %v1730 = vmul.f32 %v1727, %v1729
    %v1731 = vmul.f32 %v1722, %v1730
    %1733 = vrot.lane.b32.xlu0 %v1731, 1
    %v1734 = vpop.permute.xlu0 %1733
    %v1736 = vsub.f32 %v1727, %v1734
    %1738 = vset.pattern.permute.xlu0 0
    %1739 = vperm.xlu0 %1738, %v1730
    %v1740 = vpop.permute.xlu0 %1739
    %v1742 = vmul.f32 %v1704, %v1740
    %v1743 = vmul.f32 %v1705, %v1740
    %v1744 = vmul.f32 %v1706, %v1740
    %v1745 = vmul.f32 %v1707, %v1740
    %1747 = vset.pattern.permute.xlu0 1
    %1748 = vperm.xlu0 %1747, %v1736
    %v1749 = vpop.permute.xlu0 %1748
    %v1751 = vadd.f32 %v1742, %v1749
    %v1752 = vadd.f32 %v1743, %v1749
    %v1753 = vadd.f32 %v1744, %v1749
    %v1754 = vadd.f32 %v1745, %v1749
    %v1755 = vmax.f32 %v1751, 0.0
    %v1756 = vmax.f32 %v1752, 0.0
    %v1757 = vmax.f32 %v1753, 0.0
    %v1758 = vmax.f32 %v1754, 0.0
    %1759 = vst [vmem:[#allocation2] sm:$0xff] %v1755
    %1760 = vst [vmem:[#allocation2 + $0x8] sm:$0xff] %v1756
    %s1761 = scalar_lea.vmem [#allocation2], 16
    %1762 = vst [vmem:[%s1761] sm:$0xff] %v1757
    %1763 = vst [vmem:[%s1761 + $0x8] sm:$0xff] %v1758
    // Predicated region
    $region14: #{tpu_custom_call.1} parent=1 // pred_check
      _
    $region15: #{tpu_custom_call.1} parent=1 // pred_check_branch
      %1765 = sbr.rel (0) target = $region17
    $region16: #{tpu_custom_call.1} parent=1 // pred_region
      %s1767 = ssub.s32 512, 512
      %1768 = vsyncadd [#allocation3], %s1767
      %s1769 = sshll.u32 [#allocation2], 4
      %s1770 = int_to_ptr.vmem [resolvable:$true] %s1769
      %1775 = dma.vmem_to_hbm [thread:$0]  %s1770, 512, %s3, [#allocation3], 256, 256, 16
    $region17: #{tpu_custom_call.1} parent=1 // pred_fallthru
      _
    // Predicated region
    $region18: #{tpu_custom_call.1} parent=1 // pred_check
      _
    $region19: #{tpu_custom_call.1} parent=1 // pred_check_branch
      %1777 = sbr.rel (0) target = $region21
    $region20: #{tpu_custom_call.1} parent=1 // pred_region
      %1778 = dma.done [#allocation3], 512
    $region21: #{tpu_custom_call.1} parent=1 // pred_fallthru
      _
    %1779 = vsyncpa [#allocation3], 1

</llo_original>
